<compile_context>
chip_gen: v6e
topology: v6e:2x2x1
jax: 0.10.0
libtpu: 0.0.40
codegen_flags: <defaults>
</compile_context>

<pallas_src>
import functools

import jax
import jax.numpy as jnp
from jax.experimental import pallas as pl
from jax.experimental.pallas import tpu as pltpu  # noqa: F401  (TPU backend)

_LANE = 128


def _duma_kernel(p_rep_ref, qa_rep_ref, w_p_ref, b_p_ref, w_qa_ref, b_qa_ref,
                 kmask_qa_ref, vmask_qa_ref, bias_qa_ref, ones_qa_ref,
                 kmask_p_ref, vmask_p_ref, bias_p_ref, ones_p_ref,
                 wo1_ref, bo1_ref, wo2_ref, bo2_ref,
                 out_qa_ref, out_p_ref, *, rows_p, rows_qa):
    """Fused DUMA layer (both attention blocks), grid-less, everything in VMEM.

    p_rep_ref : (H*rows_p, 128)  p_seq rows tiled xH (lane-padded)
    qa_rep_ref: (H*rows_qa, 128) qa_seq rows tiled xH (lane-padded)
    w_*/b_*   : fused (128, 3D)/(1, 3D) projections (scale folded into Q)
    kmask/vmask: (H*rows_k, 3D) 0/1 head-block-diagonal column selectors
    bias_*    : (rows_q, H*rows_k) additive bias (batch block-diag + key padding), tiled xH
    ones_*    : (H*rows_k, H*rows_k) block-diagonal ones (per-head softmax denominator)
    wo*/bo*   : (3D, 128)/(1, 128) output projection embedded in the V column block
    """
    f32 = jnp.float32
    dn_t = (((1,), (1,)), ((), ()))  # contract last dims: A @ B.T without materializing B.T

    # Head-replicated fused projections; the first rows_seq rows double as the
    # (un-replicated) query-side projection for the other attention block.
    p_proj_rep = jnp.dot(p_rep_ref[...], w_p_ref[...],
                         preferred_element_type=f32) + b_p_ref[...]
    qa_proj_rep = jnp.dot(qa_rep_ref[...], w_qa_ref[...],
                          preferred_element_type=f32) + b_qa_ref[...]

    def attention(q_proj, kv_rep, kmask, vmask, bias, ones_bd, wo_ref, bo_ref, out_ref):
        k_rep = kv_rep * kmask          # keep only this attention's K columns, per-head blocks
        v_rep = kv_rep * vmask          # keep only this attention's V columns, per-head blocks
        # All-head scores in one matmul (masked columns contribute 0 to the contraction).
        s = jax.lax.dot_general(q_proj, k_rep, dn_t, preferred_element_type=f32) + bias
        m = jnp.max(s, axis=-1, keepdims=True)   # row-global max (softmax is shift-invariant)
        e = jnp.exp(s - m)                       # cross-batch (-1e30) / padded (-1e9) keys -> 0
        denom = jnp.dot(e, ones_bd, preferred_element_type=f32)  # per-head sums, block-broadcast
        probs = e / denom
        ctx = jnp.dot(probs, v_rep, preferred_element_type=f32)  # (rows_q, 3D), ctx in V columns
        out_ref[...] = (jnp.dot(ctx, wo_ref[...], preferred_element_type=f32)
                        + bo_ref[...]).astype(out_ref.dtype)

    # attn_qa: query = p_seq, key = value = qa_seq, key_padding_mask = qa_mask
    attention(p_proj_rep[:rows_p, :], qa_proj_rep,
              kmask_qa_ref[...], vmask_qa_ref[...], bias_qa_ref[...], ones_qa_ref[...],
              wo1_ref, bo1_ref, out_qa_ref)
    # attn_p : query = qa_seq, key = value = p_seq, key_padding_mask = p_mask
    attention(qa_proj_rep[:rows_qa, :], p_proj_rep,
              kmask_p_ref[...], vmask_p_ref[...], bias_p_ref[...], ones_p_ref[...],
              wo2_ref, bo2_ref, out_p_ref)


def duma_layer(qa_seq, p_seq, params_qa, params_p,
               qa_mask=None, p_mask=None, *, num_heads):
    """DUMALayer.forward: returns (enc_output_qa, enc_output_p), batch-first."""
    b, s_qa, d = qa_seq.shape
    s_p = p_seq.shape[1]
    assert d % num_heads == 0 and 3 * d <= _LANE
    hd = d // num_heads
    rows_p, rows_qa = b * s_p, b * s_qa
    f32 = jnp.float32

    wq1, wk1, wv1, bq1, bk1, bv1, wo1, bo1 = params_qa   # attn_qa
    wq2, wk2, wv2, bq2, bk2, bv2, wo2, bo2 = params_p    # attn_p
    scale = 1.0 / float(hd) ** 0.5

    # Fused projections with Q/K column blocks aligned across the two sequences:
    #   p_proj  = p  @ [Wq1*s | Wk2 | Wv2]   (q1: 0:d, k2: d:2d, v2: 2d:3d)
    #   qa_proj = qa @ [Wk1 | Wq2*s | Wv1]   (k1: 0:d, q2: d:2d, v1: 2d:3d)
    w_p = jnp.concatenate([wq1 * scale, wk2, wv2], axis=1).astype(f32)
    b_p = jnp.concatenate([bq1 * scale, bk2, bv2], axis=1).astype(f32)
    w_qa = jnp.concatenate([wk1, wq2 * scale, wv1], axis=1).astype(f32)
    b_qa = jnp.concatenate([bk1, bq2 * scale, bv1], axis=1).astype(f32)

    # Lane-dense inputs: zero-pad last dim to 128 and pad the weights to match;
    # tile the rows xH host-side for the head-block-diagonal K/V packing.
    p_pad = jnp.pad(p_seq.reshape(rows_p, d).astype(f32), ((0, 0), (0, _LANE - d)))
    qa_pad = jnp.pad(qa_seq.reshape(rows_qa, d).astype(f32), ((0, 0), (0, _LANE - d)))
    p_rep = jnp.tile(p_pad, (num_heads, 1))        # (H*rows_p, 128)
    qa_rep = jnp.tile(qa_pad, (num_heads, 1))      # (H*rows_qa, 128)
    w_p = jnp.pad(w_p, ((0, _LANE - d), (0, 0)))   # (128, 3d)
    w_qa = jnp.pad(w_qa, ((0, _LANE - d), (0, 0)))

    def head_mask(rows_k, col_off):
        # (H*rows_k, 3d): block h selects projection columns [col_off+h*hd, col_off+(h+1)*hd).
        h_of_row = jnp.repeat(jnp.arange(num_heads), rows_k)[:, None]
        c = jnp.arange(3 * d)[None, :]
        lo = col_off + h_of_row * hd
        return ((c >= lo) & (c < lo + hd)).astype(f32)

    def add_bias(key_mask, s_q, s_k):
        # (b*s_q, H*b*s_k): block-diagonal batch mask (-1e30 cross-batch) + key padding
        # (-1e9, finite -> NaN-safe), tiled xH along columns (head-major, matching K_rep).
        rb = (jnp.arange(b * s_q) // s_q)[:, None]
        cb = (jnp.arange(b * s_k) // s_k)[None, :]
        bias = jnp.where(rb == cb, 0.0, -1e30).astype(f32)
        if key_mask is not None:
            bias = bias + key_mask.astype(f32).reshape(1, b * s_k) * (-1e9)
        return jnp.tile(bias, (1, num_heads))

    def block_ones(rows_k):
        blk = jnp.arange(num_heads * rows_k) // rows_k
        return (blk[:, None] == blk[None, :]).astype(f32)

    def out_proj(wo, bo):
        # (3d, 128): ctx lives in the V column block [2d:3d); output lane-padded to 128.
        w = jnp.zeros((3 * d, _LANE), f32).at[2 * d:3 * d, :d].set(wo.astype(f32))
        bb = jnp.zeros((1, _LANE), f32).at[:, :d].set(bo.astype(f32))
        return w, bb

    kmask_qa = head_mask(rows_qa, 0)        # attn_qa keys:   k1 at cols [0, d)   of qa_proj
    vmask_qa = head_mask(rows_qa, 2 * d)    # attn_qa values: v1 at cols [2d, 3d) of qa_proj
    kmask_p = head_mask(rows_p, d)          # attn_p  keys:   k2 at cols [d, 2d)  of p_proj
    vmask_p = head_mask(rows_p, 2 * d)      # attn_p  values: v2 at cols [2d, 3d) of p_proj
    bias_qa = add_bias(qa_mask, s_p, s_qa)  # attn_qa: queries = p,  keys = qa
    bias_p = add_bias(p_mask, s_qa, s_p)    # attn_p:  queries = qa, keys = p
    ones_qa = block_ones(rows_qa)
    ones_p = block_ones(rows_p)
    wo1_e, bo1_e = out_proj(wo1, bo1)
    wo2_e, bo2_e = out_proj(wo2, bo2)

    kernel = functools.partial(_duma_kernel, rows_p=rows_p, rows_qa=rows_qa)

    # Single grid-less launch: every operand is tiny and lives whole in VMEM,
    # both outputs written once with lane-dense (rows, 128) stores.
    out_qa_pad, out_p_pad = pl.pallas_call(
        kernel,
        out_shape=(jax.ShapeDtypeStruct((rows_p, _LANE), p_seq.dtype),
                   jax.ShapeDtypeStruct((rows_qa, _LANE), qa_seq.dtype)),
    )(p_rep, qa_rep, w_p, b_p, w_qa, b_qa,
      kmask_qa, vmask_qa, bias_qa, ones_qa,
      kmask_p, vmask_p, bias_p, ones_p,
      wo1_e, bo1_e, wo2_e, bo2_e)

    return (out_qa_pad[:, :d].reshape(b, s_p, d),
            out_p_pad[:, :d].reshape(b, s_qa, d))


def init_mha_params(key, d_model):
    ks = jax.random.split(key, 8)
    s = 1.0 / (d_model ** 0.5)
    wq = jax.random.normal(ks[0], (d_model, d_model), jnp.float32) * s
    wk = jax.random.normal(ks[1], (d_model, d_model), jnp.float32) * s
    wv = jax.random.normal(ks[2], (d_model, d_model), jnp.float32) * s
    wo = jax.random.normal(ks[3], (d_model, d_model), jnp.float32) * s
    bq = jax.random.normal(ks[4], (1, d_model), jnp.float32) * 0.02
    bk = jax.random.normal(ks[5], (1, d_model), jnp.float32) * 0.02
    bv = jax.random.normal(ks[6], (1, d_model), jnp.float32) * 0.02
    bo = jax.random.normal(ks[7], (1, d_model), jnp.float32) * 0.02
    return (wq, wk, wv, bq, bk, bv, wo, bo)


# ----------------------------- pure-JAX reference -----------------------------
def _mha_reference(query, key, value, key_padding_mask, params, num_heads):
    wq, wk, wv, bq, bk, bv, wo, bo = params
    b, sq, d = query.shape
    sk = key.shape[1]
    hd = d // num_heads
    scale = 1.0 / float(hd) ** 0.5
    q = (query @ wq + bq).reshape(b, sq, num_heads, hd).transpose(0, 2, 1, 3) * scale
    k = (key @ wk + bk).reshape(b, sk, num_heads, hd).transpose(0, 2, 1, 3)
    v = (value @ wv + bv).reshape(b, sk, num_heads, hd).transpose(0, 2, 1, 3)
    s = jnp.einsum('bhqd,bhkd->bhqk', q, k)
    if key_padding_mask is not None:
        s = s + jnp.where(key_padding_mask, -1e9, 0.0)[:, None, None, :]
    p = jax.nn.softmax(s, axis=-1)
    ctx = jnp.einsum('bhqk,bhkd->bhqd', p, v).transpose(0, 2, 1, 3).reshape(b, sq, d)
    return ctx @ wo + bo


def _duma_reference(qa_seq, p_seq, params_qa, params_p, qa_mask, p_mask, num_heads):
    return (_mha_reference(p_seq, qa_seq, qa_seq, qa_mask, params_qa, num_heads),
            _mha_reference(qa_seq, p_seq, p_seq, p_mask, params_p, num_heads))


if __name__ == "__main__":
    B, S_QA, S_P, D, H = 2, 8, 6, 32, 4

    root = jax.random.PRNGKey(0)
    k_qa, k_p, k_x1, k_x2 = jax.random.split(root, 4)

    params_qa = init_mha_params(k_qa, D)   # self.attn_qa
    params_p = init_mha_params(k_p, D)     # self.attn_p

    qa_seq = jax.random.normal(k_x1, (B, S_QA, D), jnp.float32)
    p_seq = jax.random.normal(k_x2, (B, S_P, D), jnp.float32)

    # key_padding_mask: True == padded position to ignore
    qa_mask = jnp.zeros((B, S_QA), jnp.bool_).at[1, -2:].set(True)
    p_mask = jnp.zeros((B, S_P), jnp.bool_).at[1, -1:].set(True)

    duma_fn = jax.jit(functools.partial(duma_layer, num_heads=H))
    enc_qa, enc_p = duma_fn(qa_seq, p_seq, params_qa, params_p,
                            qa_mask=qa_mask, p_mask=p_mask)
    jax.block_until_ready((enc_qa, enc_p))

    assert enc_qa.shape == (B, S_P, D)
    assert enc_p.shape == (B, S_QA, D)
    assert bool(jnp.all(jnp.isfinite(enc_qa))) and bool(jnp.all(jnp.isfinite(enc_p)))

    ref_qa, ref_p = _duma_reference(qa_seq, p_seq, params_qa, params_p,
                                    qa_mask, p_mask, H)
    assert bool(jnp.allclose(enc_qa, ref_qa, atol=2e-2, rtol=2e-2))
    assert bool(jnp.allclose(enc_p, ref_p, atol=2e-2, rtol=2e-2))

    print("KERNEL_OK")
</pallas_src>

<mosaic_0001>
module attributes {stable_mosaic.version = 11 : i64} {
  func.func @_duma_kernel(%arg0: memref<48x128xf32, #tpu.memory_space<vmem>>, %arg1: memref<64x128xf32, #tpu.memory_space<vmem>>, %arg2: memref<128x96xf32, #tpu.memory_space<vmem>>, %arg3: memref<1x96xf32, #tpu.memory_space<vmem>>, %arg4: memref<128x96xf32, #tpu.memory_space<vmem>>, %arg5: memref<1x96xf32, #tpu.memory_space<vmem>>, %arg6: memref<64x96xf32, #tpu.memory_space<vmem>>, %arg7: memref<64x96xf32, #tpu.memory_space<vmem>>, %arg8: memref<12x64xf32, #tpu.memory_space<vmem>>, %arg9: memref<64x64xf32, #tpu.memory_space<vmem>>, %arg10: memref<48x96xf32, #tpu.memory_space<vmem>>, %arg11: memref<48x96xf32, #tpu.memory_space<vmem>>, %arg12: memref<16x48xf32, #tpu.memory_space<vmem>>, %arg13: memref<48x48xf32, #tpu.memory_space<vmem>>, %arg14: memref<96x128xf32, #tpu.memory_space<vmem>>, %arg15: memref<1x128xf32, #tpu.memory_space<vmem>>, %arg16: memref<96x128xf32, #tpu.memory_space<vmem>>, %arg17: memref<1x128xf32, #tpu.memory_space<vmem>>, %arg18: memref<12x128xf32, #tpu.memory_space<vmem>>, %arg19: memref<16x128xf32, #tpu.memory_space<vmem>>) attributes {dimension_semantics = [], scalar_prefetch = 0 : i64, scratch_operands = 0 : i64, tpu.core_type = #tpu.core_type<tc>} {
    %c0 = arith.constant 0 : index
    %c0_0 = arith.constant 0 : index
    %0 = vector.load %arg0[%c0, %c0_0] : memref<48x128xf32, #tpu.memory_space<vmem>>, vector<48x128xf32>
    %c0_1 = arith.constant 0 : index
    %c0_2 = arith.constant 0 : index
    %1 = vector.load %arg2[%c0_1, %c0_2] : memref<128x96xf32, #tpu.memory_space<vmem>>, vector<128x96xf32>
    %cst = arith.constant dense<0.000000e+00> : vector<48x96xf32>
    %2 = tpu.matmul %0, %1, %cst {dimension_numbers = #tpu.dot_dimension_numbers<[1], [0], [0], [1], [0, 0, 1, 1], [], []>} : vector<48x128xf32>, vector<128x96xf32>, vector<48x96xf32> -> vector<48x96xf32>
    %c0_3 = arith.constant 0 : index
    %c0_4 = arith.constant 0 : index
    %3 = vector.load %arg3[%c0_3, %c0_4] : memref<1x96xf32, #tpu.memory_space<vmem>>, vector<1x96xf32>
    %4 = vector.broadcast %3 : vector<1x96xf32> to vector<48x96xf32>
    %5 = arith.addf %2, %4 : vector<48x96xf32>
    %c0_5 = arith.constant 0 : index
    %c0_6 = arith.constant 0 : index
    %6 = vector.load %arg1[%c0_5, %c0_6] : memref<64x128xf32, #tpu.memory_space<vmem>>, vector<64x128xf32>
    %c0_7 = arith.constant 0 : index
    %c0_8 = arith.constant 0 : index
    %7 = vector.load %arg4[%c0_7, %c0_8] : memref<128x96xf32, #tpu.memory_space<vmem>>, vector<128x96xf32>
    %cst_9 = arith.constant dense<0.000000e+00> : vector<64x96xf32>
    %8 = tpu.matmul %6, %7, %cst_9 {dimension_numbers = #tpu.dot_dimension_numbers<[1], [0], [0], [1], [0, 0, 1, 1], [], []>} : vector<64x128xf32>, vector<128x96xf32>, vector<64x96xf32> -> vector<64x96xf32>
    %c0_10 = arith.constant 0 : index
    %c0_11 = arith.constant 0 : index
    %9 = vector.load %arg5[%c0_10, %c0_11] : memref<1x96xf32, #tpu.memory_space<vmem>>, vector<1x96xf32>
    %10 = vector.broadcast %9 : vector<1x96xf32> to vector<64x96xf32>
    %11 = arith.addf %8, %10 : vector<64x96xf32>
    %12 = vector.extract_strided_slice %5 {offsets = [0, 0], sizes = [12, 96], strides = [1, 1]} : vector<48x96xf32> to vector<12x96xf32>
    %c0_12 = arith.constant 0 : index
    %c0_13 = arith.constant 0 : index
    %13 = vector.load %arg6[%c0_12, %c0_13] : memref<64x96xf32, #tpu.memory_space<vmem>>, vector<64x96xf32>
    %c0_14 = arith.constant 0 : index
    %c0_15 = arith.constant 0 : index
    %14 = vector.load %arg7[%c0_14, %c0_15] : memref<64x96xf32, #tpu.memory_space<vmem>>, vector<64x96xf32>
    %c0_16 = arith.constant 0 : index
    %c0_17 = arith.constant 0 : index
    %15 = vector.load %arg8[%c0_16, %c0_17] : memref<12x64xf32, #tpu.memory_space<vmem>>, vector<12x64xf32>
    %c0_18 = arith.constant 0 : index
    %c0_19 = arith.constant 0 : index
    %16 = vector.load %arg9[%c0_18, %c0_19] : memref<64x64xf32, #tpu.memory_space<vmem>>, vector<64x64xf32>
    %17 = arith.mulf %11, %13 : vector<64x96xf32>
    %18 = arith.mulf %11, %14 : vector<64x96xf32>
    %cst_20 = arith.constant dense<0.000000e+00> : vector<12x64xf32>
    %19 = tpu.matmul %12, %17, %cst_20 {dimension_numbers = #tpu.dot_dimension_numbers<[1], [1], [0], [0], [0, 0, 1, 0], [], []>} : vector<12x96xf32>, vector<64x96xf32>, vector<12x64xf32> -> vector<12x64xf32>
    %20 = arith.addf %19, %15 : vector<12x64xf32>
    %cst_21 = arith.constant dense<0xFF800000> : vector<12xf32>
    %21 = vector.multi_reduction <maximumf>, %20, %cst_21 [1] : vector<12x64xf32> to vector<12xf32>
    %22 = vector.shape_cast %21 : vector<12xf32> to vector<12x1xf32>
    %23 = vector.broadcast %22 : vector<12x1xf32> to vector<12x64xf32>
    %24 = arith.subf %20, %23 : vector<12x64xf32>
    %25 = math.exp %24 : vector<12x64xf32>
    %cst_22 = arith.constant dense<0.000000e+00> : vector<12x64xf32>
    %26 = tpu.matmul %25, %16, %cst_22 {dimension_numbers = #tpu.dot_dimension_numbers<[1], [0], [0], [1], [0, 0, 1, 1], [], []>} : vector<12x64xf32>, vector<64x64xf32>, vector<12x64xf32> -> vector<12x64xf32>
    %27 = arith.divf %25, %26 : vector<12x64xf32>
    %cst_23 = arith.constant dense<0.000000e+00> : vector<12x96xf32>
    %28 = tpu.matmul %27, %18, %cst_23 {dimension_numbers = #tpu.dot_dimension_numbers<[1], [0], [0], [1], [0, 0, 1, 1], [], []>} : vector<12x64xf32>, vector<64x96xf32>, vector<12x96xf32> -> vector<12x96xf32>
    %c0_24 = arith.constant 0 : index
    %c0_25 = arith.constant 0 : index
    %29 = vector.load %arg14[%c0_24, %c0_25] : memref<96x128xf32, #tpu.memory_space<vmem>>, vector<96x128xf32>
    %cst_26 = arith.constant dense<0.000000e+00> : vector<12x128xf32>
    %30 = tpu.matmul %28, %29, %cst_26 {dimension_numbers = #tpu.dot_dimension_numbers<[1], [0], [0], [1], [0, 0, 1, 1], [], []>} : vector<12x96xf32>, vector<96x128xf32>, vector<12x128xf32> -> vector<12x128xf32>
    %c0_27 = arith.constant 0 : index
    %c0_28 = arith.constant 0 : index
    %31 = vector.load %arg15[%c0_27, %c0_28] : memref<1x128xf32, #tpu.memory_space<vmem>>, vector<1x128xf32>
    %32 = vector.broadcast %31 : vector<1x128xf32> to vector<12x128xf32>
    %33 = arith.addf %30, %32 : vector<12x128xf32>
    %c0_29 = arith.constant 0 : index
    %c0_30 = arith.constant 0 : index
    %34 = vector.load %arg18[%c0_29, %c0_30] : memref<12x128xf32, #tpu.memory_space<vmem>>, vector<12x128xf32>
    tpu.vector_store %arg18[%c0_29, %c0_30], %33 {strides = array<i32>} : memref<12x128xf32, #tpu.memory_space<vmem>>, vector<12x128xf32>,
    %35 = vector.extract_strided_slice %11 {offsets = [0, 0], sizes = [16, 96], strides = [1, 1]} : vector<64x96xf32> to vector<16x96xf32>
    %c0_31 = arith.constant 0 : index
    %c0_32 = arith.constant 0 : index
    %36 = vector.load %arg10[%c0_31, %c0_32] : memref<48x96xf32, #tpu.memory_space<vmem>>, vector<48x96xf32>
    %c0_33 = arith.constant 0 : index
    %c0_34 = arith.constant 0 : index
    %37 = vector.load %arg11[%c0_33, %c0_34] : memref<48x96xf32, #tpu.memory_space<vmem>>, vector<48x96xf32>
    %c0_35 = arith.constant 0 : index
    %c0_36 = arith.constant 0 : index
    %38 = vector.load %arg12[%c0_35, %c0_36] : memref<16x48xf32, #tpu.memory_space<vmem>>, vector<16x48xf32>
    %c0_37 = arith.constant 0 : index
    %c0_38 = arith.constant 0 : index
    %39 = vector.load %arg13[%c0_37, %c0_38] : memref<48x48xf32, #tpu.memory_space<vmem>>, vector<48x48xf32>
    %40 = arith.mulf %5, %36 : vector<48x96xf32>
    %41 = arith.mulf %5, %37 : vector<48x96xf32>
    %cst_39 = arith.constant dense<0.000000e+00> : vector<16x48xf32>
    %42 = tpu.matmul %35, %40, %cst_39 {dimension_numbers = #tpu.dot_dimension_numbers<[1], [1], [0], [0], [0, 0, 1, 0], [], []>} : vector<16x96xf32>, vector<48x96xf32>, vector<16x48xf32> -> vector<16x48xf32>
    %43 = arith.addf %42, %38 : vector<16x48xf32>
    %cst_40 = arith.constant dense<0xFF800000> : vector<16xf32>
    %44 = vector.multi_reduction <maximumf>, %43, %cst_40 [1] : vector<16x48xf32> to vector<16xf32>
    %45 = vector.shape_cast %44 : vector<16xf32> to vector<16x1xf32>
    %46 = vector.broadcast %45 : vector<16x1xf32> to vector<16x48xf32>
    %47 = arith.subf %43, %46 : vector<16x48xf32>
    %48 = math.exp %47 : vector<16x48xf32>
    %cst_41 = arith.constant dense<0.000000e+00> : vector<16x48xf32>
    %49 = tpu.matmul %48, %39, %cst_41 {dimension_numbers = #tpu.dot_dimension_numbers<[1], [0], [0], [1], [0, 0, 1, 1], [], []>} : vector<16x48xf32>, vector<48x48xf32>, vector<16x48xf32> -> vector<16x48xf32>
    %50 = arith.divf %48, %49 : vector<16x48xf32>
    %cst_42 = arith.constant dense<0.000000e+00> : vector<16x96xf32>
    %51 = tpu.matmul %50, %41, %cst_42 {dimension_numbers = #tpu.dot_dimension_numbers<[1], [0], [0], [1], [0, 0, 1, 1], [], []>} : vector<16x48xf32>, vector<48x96xf32>, vector<16x96xf32> -> vector<16x96xf32>
    %c0_43 = arith.constant 0 : index
    %c0_44 = arith.constant 0 : index
    %52 = vector.load %arg16[%c0_43, %c0_44] : memref<96x128xf32, #tpu.memory_space<vmem>>, vector<96x128xf32>
    %cst_45 = arith.constant dense<0.000000e+00> : vector<16x128xf32>
    %53 = tpu.matmul %51, %52, %cst_45 {dimension_numbers = #tpu.dot_dimension_numbers<[1], [0], [0], [1], [0, 0, 1, 1], [], []>} : vector<16x96xf32>, vector<96x128xf32>, vector<16x128xf32> -> vector<16x128xf32>
    %c0_46 = arith.constant 0 : index
    %c0_47 = arith.constant 0 : index
    %54 = vector.load %arg17[%c0_46, %c0_47] : memref<1x128xf32, #tpu.memory_space<vmem>>, vector<1x128xf32>
    %55 = vector.broadcast %54 : vector<1x128xf32> to vector<16x128xf32>
    %56 = arith.addf %53, %55 : vector<16x128xf32>
    %c0_48 = arith.constant 0 : index
    %c0_49 = arith.constant 0 : index
    %57 = vector.load %arg19[%c0_48, %c0_49] : memref<16x128xf32, #tpu.memory_space<vmem>>, vector<16x128xf32>
    tpu.vector_store %arg19[%c0_48, %c0_49], %56 {strides = array<i32>} : memref<16x128xf32, #tpu.memory_space<vmem>>, vector<16x128xf32>,
    return
  }
}

</mosaic_0001>

<llo_original>
// kernel: tile.39
$region0: #{tile.39}
  %s0 = inlined_call_operand.vmem [shape: f32[16,4,12], index: 0, kind: input, shape index: {}]
  %s1 = inlined_call_operand.vmem [shape: f32[16,48], index: 1, kind: output, shape index: {}]
  $region1: #{tile.39} parent=0
    #allocation0 [shape = 'u8[65536]{0}', space=vmem, size = 0x10000, scoped, tag = 'scoped mem for input reshape']
    %s3 = sshll.u32 1, 4
    %s4 = ssub.s32 %s3, 1
    %s5 = smul.addr 4, 15
    %s6 = scalar_lea.vmem %s0, %s5
    %v7 = vld [vmem:[%s6] sm:%s4]
    %s8 = scalar_lea.vmem [#allocation0], 120
    %9 = vst [vmem:[%s8] sm:%s4] %v7
    %s10 = smul.addr 4, 14
    %s11 = scalar_lea.vmem %s0, %s10
    %v12 = vld [vmem:[%s11] sm:%s4]
    %s13 = scalar_lea.vmem [#allocation0], 112
    %14 = vst [vmem:[%s13] sm:%s4] %v12
    %s15 = smul.addr 4, 13
    %s16 = scalar_lea.vmem %s0, %s15
    %v17 = vld [vmem:[%s16] sm:%s4]
    %s18 = scalar_lea.vmem [#allocation0], 104
    %19 = vst [vmem:[%s18] sm:%s4] %v17
    %s20 = smul.addr 4, 12
    %s21 = scalar_lea.vmem %s0, %s20
    %v22 = vld [vmem:[%s21] sm:%s4]
    %s23 = scalar_lea.vmem [#allocation0], 96
    %24 = vst [vmem:[%s23] sm:%s4] %v22
    %s25 = smul.addr 4, 11
    %s26 = scalar_lea.vmem %s0, %s25
    %v27 = vld [vmem:[%s26] sm:%s4]
    %s28 = scalar_lea.vmem [#allocation0], 88
    %29 = vst [vmem:[%s28] sm:%s4] %v27
    %s30 = smul.addr 4, 10
    %s31 = scalar_lea.vmem %s0, %s30
    %v32 = vld [vmem:[%s31] sm:%s4]
    %s33 = scalar_lea.vmem [#allocation0], 80
    %34 = vst [vmem:[%s33] sm:%s4] %v32
    %s35 = smul.addr 4, 9
    %s36 = scalar_lea.vmem %s0, %s35
    %v37 = vld [vmem:[%s36] sm:%s4]
    %s38 = scalar_lea.vmem [#allocation0], 72
    %39 = vst [vmem:[%s38] sm:%s4] %v37
    %s40 = smul.addr 4, 8
    %s41 = scalar_lea.vmem %s0, %s40
    %v42 = vld [vmem:[%s41] sm:%s4]
    %s43 = scalar_lea.vmem [#allocation0], 64
    %44 = vst [vmem:[%s43] sm:%s4] %v42
    %s45 = smul.addr 4, 7
    %s46 = scalar_lea.vmem %s0, %s45
    %v47 = vld [vmem:[%s46] sm:%s4]
    %s48 = scalar_lea.vmem [#allocation0], 56
    %49 = vst [vmem:[%s48] sm:%s4] %v47
    %s50 = smul.addr 4, 6
    %s51 = scalar_lea.vmem %s0, %s50
    %v52 = vld [vmem:[%s51] sm:%s4]
    %s53 = scalar_lea.vmem [#allocation0], 48
    %54 = vst [vmem:[%s53] sm:%s4] %v52
    %s55 = smul.addr 4, 5
    %s56 = scalar_lea.vmem %s0, %s55
    %v57 = vld [vmem:[%s56] sm:%s4]
    %s58 = scalar_lea.vmem [#allocation0], 40
    %59 = vst [vmem:[%s58] sm:%s4] %v57
    %s60 = smul.addr 4, 4
    %s61 = scalar_lea.vmem %s0, %s60
    %v62 = vld [vmem:[%s61] sm:%s4]
    %s63 = scalar_lea.vmem [#allocation0], 32
    %64 = vst [vmem:[%s63] sm:%s4] %v62
    %s65 = smul.addr 4, 3
    %s66 = scalar_lea.vmem %s0, %s65
    %v67 = vld [vmem:[%s66] sm:%s4]
    %s68 = scalar_lea.vmem [#allocation0], 24
    %69 = vst [vmem:[%s68] sm:%s4] %v67
    %s70 = smul.addr 4, 2
    %s71 = scalar_lea.vmem %s0, %s70
    %v72 = vld [vmem:[%s71] sm:%s4]
    %s73 = scalar_lea.vmem [#allocation0], 16
    %74 = vst [vmem:[%s73] sm:%s4] %v72
    %s75 = scalar_lea.vmem %s0, 4
    %v76 = vld [vmem:[%s75] sm:%s4]
    %s77 = scalar_lea.vmem [#allocation0], 8
    %78 = vst [vmem:[%s77] sm:%s4] %v76
    %v79 = vld [vmem:[%s0] sm:%s4]
    %80 = vst [vmem:[#allocation0] sm:%s4] %v79
    %v81 = vld [vmem:[#allocation0] ss:$8 sm:$0xf]
    %v82 = vld [vmem:[#allocation0] ss:$8 sm:$0xf0]
    %vm83 = vcmask 1047556
    %v84 = vsel %vm83, %v82, %v81
    %vm85 = vcmask 97280
    %86 = vst.msk [vmem:[%s1] sm:$0xff] %vm85, %v84
    %s87 = scalar_lea.vmem [#allocation0], 64
    %v88 = vld [vmem:[%s87] ss:$8 sm:$0xf]
    %s89 = scalar_lea.vmem [#allocation0], 64
    %v90 = vld [vmem:[%s89] ss:$8 sm:$0xf0]
    %vm91 = vcmask 1047556
    %v92 = vsel %vm91, %v90, %v88
    %vm93 = vcmask 97280
    %s94 = scalar_lea.vmem %s1, 8
    %95 = vst.msk [vmem:[%s94] sm:$0xff] %vm93, %v92
    %s96 = scalar_lea.vmem [#allocation0], 3
    %v97 = vld [vmem:[%s96] ss:$8 sm:$0xf]
    %s98 = scalar_lea.vmem [#allocation0], 3
    %v99 = vld [vmem:[%s98] ss:$8 sm:$0xf0]
    %vm100 = vcmask 1047556
    %v101 = vsel %vm100, %v99, %v97
    %102 = vrot.lane.b32.xlu0 %v101, 36
    %v103 = vpop.permute.xlu0 %102
    %vm104 = vcmask 392480
    %105 = vst.msk [vmem:[%s1] sm:$0xff] %vm104, %v103
    %s106 = scalar_lea.vmem [#allocation0], 67
    %v107 = vld [vmem:[%s106] ss:$8 sm:$0xf]
    %s108 = scalar_lea.vmem [#allocation0], 67
    %v109 = vld [vmem:[%s108] ss:$8 sm:$0xf0]
    %vm110 = vcmask 1047556
    %v111 = vsel %vm110, %v109, %v107
    %112 = vrot.lane.b32.xlu0 %v111, 36
    %v113 = vpop.permute.xlu0 %112
    %vm114 = vcmask 392480
    %s115 = scalar_lea.vmem %s1, 8
    %116 = vst.msk [vmem:[%s115] sm:$0xff] %vm114, %v113
    %s117 = scalar_lea.vmem [#allocation0], 2
    %v118 = vld [vmem:[%s117] ss:$8 sm:$0xf]
    %s119 = scalar_lea.vmem [#allocation0], 2
    %v120 = vld [vmem:[%s119] ss:$8 sm:$0xf0]
    %vm121 = vcmask 1047556
    %v122 = vsel %vm121, %v120, %v118
    %123 = vrot.lane.b32.xlu0 %v122, 24
    %v124 = vpop.permute.xlu0 %123
    %vm125 = vcmask 294080
    %126 = vst.msk [vmem:[%s1] sm:$0xff] %vm125, %v124
    %s127 = scalar_lea.vmem [#allocation0], 66
    %v128 = vld [vmem:[%s127] ss:$8 sm:$0xf]
    %s129 = scalar_lea.vmem [#allocation0], 66
    %v130 = vld [vmem:[%s129] ss:$8 sm:$0xf0]
    %vm131 = vcmask 1047556
    %v132 = vsel %vm131, %v130, %v128
    %133 = vrot.lane.b32.xlu0 %v132, 24
    %v134 = vpop.permute.xlu0 %133
    %vm135 = vcmask 294080
    %s136 = scalar_lea.vmem %s1, 8
    %137 = vst.msk [vmem:[%s136] sm:$0xff] %vm135, %v134
    %s138 = scalar_lea.vmem [#allocation0], 1
    %v139 = vld [vmem:[%s138] ss:$8 sm:$0xf]
    %s140 = scalar_lea.vmem [#allocation0], 1
    %v141 = vld [vmem:[%s140] ss:$8 sm:$0xf0]
    %vm142 = vcmask 1047556
    %v143 = vsel %vm142, %v141, %v139
    %144 = vrot.lane.b32.xlu0 %v143, 12
    %v145 = vpop.permute.xlu0 %144
    %vm146 = vcmask 195680
    %147 = vst.msk [vmem:[%s1] sm:$0xff] %vm146, %v145
    %s148 = scalar_lea.vmem [#allocation0], 65
    %v149 = vld [vmem:[%s148] ss:$8 sm:$0xf]
    %s150 = scalar_lea.vmem [#allocation0], 65
    %v151 = vld [vmem:[%s150] ss:$8 sm:$0xf0]
    %vm152 = vcmask 1047556
    %v153 = vsel %vm152, %v151, %v149
    %154 = vrot.lane.b32.xlu0 %v153, 12
    %v155 = vpop.permute.xlu0 %154
    %vm156 = vcmask 195680
    %s157 = scalar_lea.vmem %s1, 8
    %158 = vst.msk [vmem:[%s157] sm:$0xff] %vm156, %v155

// kernel: tile.34
$region0: #{tile.34}
  %s0 = inlined_call_operand.vmem [shape: f32[12,4,16], index: 0, kind: input, shape index: {}]
  %s1 = inlined_call_operand.vmem [shape: f32[12,64], index: 1, kind: output, shape index: {}]
  $region1: #{tile.34} parent=0
    #allocation0 [shape = 'u8[49152]{0}', space=vmem, size = 0xc000, scoped, tag = 'scoped mem for input reshape']
    %s3 = sshll.u32 1, 4
    %s4 = ssub.s32 %s3, 1
    %s5 = smul.addr 4, 11
    %s6 = scalar_lea.vmem %s0, %s5
    %v7 = vld [vmem:[%s6] sm:%s4]
    %s8 = scalar_lea.vmem [#allocation0], 88
    %9 = vst [vmem:[%s8] sm:%s4] %v7
    %s10 = smul.addr 4, 10
    %s11 = scalar_lea.vmem %s0, %s10
    %v12 = vld [vmem:[%s11] sm:%s4]
    %s13 = scalar_lea.vmem [#allocation0], 80
    %14 = vst [vmem:[%s13] sm:%s4] %v12
    %s15 = smul.addr 4, 9
    %s16 = scalar_lea.vmem %s0, %s15
    %v17 = vld [vmem:[%s16] sm:%s4]
    %s18 = scalar_lea.vmem [#allocation0], 72
    %19 = vst [vmem:[%s18] sm:%s4] %v17
    %s20 = smul.addr 4, 8
    %s21 = scalar_lea.vmem %s0, %s20
    %v22 = vld [vmem:[%s21] sm:%s4]
    %s23 = scalar_lea.vmem [#allocation0], 64
    %24 = vst [vmem:[%s23] sm:%s4] %v22
    %s25 = smul.addr 4, 7
    %s26 = scalar_lea.vmem %s0, %s25
    %v27 = vld [vmem:[%s26] sm:%s4]
    %s28 = scalar_lea.vmem [#allocation0], 56
    %29 = vst [vmem:[%s28] sm:%s4] %v27
    %s30 = smul.addr 4, 6
    %s31 = scalar_lea.vmem %s0, %s30
    %v32 = vld [vmem:[%s31] sm:%s4]
    %s33 = scalar_lea.vmem [#allocation0], 48
    %34 = vst [vmem:[%s33] sm:%s4] %v32
    %s35 = smul.addr 4, 5
    %s36 = scalar_lea.vmem %s0, %s35
    %v37 = vld [vmem:[%s36] sm:%s4]
    %s38 = scalar_lea.vmem [#allocation0], 40
    %39 = vst [vmem:[%s38] sm:%s4] %v37
    %s40 = smul.addr 4, 4
    %s41 = scalar_lea.vmem %s0, %s40
    %v42 = vld [vmem:[%s41] sm:%s4]
    %s43 = scalar_lea.vmem [#allocation0], 32
    %44 = vst [vmem:[%s43] sm:%s4] %v42
    %s45 = smul.addr 4, 3
    %s46 = scalar_lea.vmem %s0, %s45
    %v47 = vld [vmem:[%s46] sm:%s4]
    %s48 = scalar_lea.vmem [#allocation0], 24
    %49 = vst [vmem:[%s48] sm:%s4] %v47
    %s50 = smul.addr 4, 2
    %s51 = scalar_lea.vmem %s0, %s50
    %v52 = vld [vmem:[%s51] sm:%s4]
    %s53 = scalar_lea.vmem [#allocation0], 16
    %54 = vst [vmem:[%s53] sm:%s4] %v52
    %s55 = scalar_lea.vmem %s0, 4
    %v56 = vld [vmem:[%s55] sm:%s4]
    %s57 = scalar_lea.vmem [#allocation0], 8
    %58 = vst [vmem:[%s57] sm:%s4] %v56
    %v59 = vld [vmem:[%s0] sm:%s4]
    %60 = vst [vmem:[#allocation0] sm:%s4] %v59
    %v61 = vld [vmem:[#allocation0] ss:$8 sm:$0xf]
    %v62 = vld [vmem:[#allocation0] ss:$8 sm:$0xf0]
    %vm63 = vcmask 1047556
    %v64 = vsel %vm63, %v62, %v61
    %vm65 = vcmask 130048
    %66 = vst.msk [vmem:[%s1] sm:$0xff] %vm65, %v64
    %s67 = scalar_lea.vmem [#allocation0], 64
    %v68 = vld [vmem:[%s67] ss:$8 sm:$0xf]
    %vm69 = vcmask 130048
    %s70 = scalar_lea.vmem %s1, 8
    %71 = vst.msk [vmem:[%s70] sm:$0xf] %vm69, %v68
    %s72 = scalar_lea.vmem [#allocation0], 3
    %v73 = vld [vmem:[%s72] ss:$8 sm:$0xf]
    %s74 = scalar_lea.vmem [#allocation0], 3
    %v75 = vld [vmem:[%s74] ss:$8 sm:$0xf0]
    %vm76 = vcmask 1047556
    %v77 = vsel %vm76, %v75, %v73
    %78 = vrot.lane.b32.xlu0 %v77, 48
    %v79 = vpop.permute.xlu0 %78
    %vm80 = vcmask 523648
    %81 = vst.msk [vmem:[%s1] sm:$0xff] %vm80, %v79
    %s82 = scalar_lea.vmem [#allocation0], 67
    %v83 = vld [vmem:[%s82] ss:$8 sm:$0xf]
    %84 = vrot.lane.b32.xlu0 %v83, 48
    %v85 = vpop.permute.xlu0 %84
    %vm86 = vcmask 523648
    %s87 = scalar_lea.vmem %s1, 8
    %88 = vst.msk [vmem:[%s87] sm:$0xf] %vm86, %v85
    %s89 = scalar_lea.vmem [#allocation0], 2
    %v90 = vld [vmem:[%s89] ss:$8 sm:$0xf]
    %s91 = scalar_lea.vmem [#allocation0], 2
    %v92 = vld [vmem:[%s91] ss:$8 sm:$0xf0]
    %vm93 = vcmask 1047556
    %v94 = vsel %vm93, %v92, %v90
    %95 = vrot.lane.b32.xlu0 %v94, 32
    %v96 = vpop.permute.xlu0 %95
    %vm97 = vcmask 392448
    %98 = vst.msk [vmem:[%s1] sm:$0xff] %vm97, %v96
    %s99 = scalar_lea.vmem [#allocation0], 66
    %v100 = vld [vmem:[%s99] ss:$8 sm:$0xf]
    %101 = vrot.lane.b32.xlu0 %v100, 32
    %v102 = vpop.permute.xlu0 %101
    %vm103 = vcmask 392448
    %s104 = scalar_lea.vmem %s1, 8
    %105 = vst.msk [vmem:[%s104] sm:$0xf] %vm103, %v102
    %s106 = scalar_lea.vmem [#allocation0], 1
    %v107 = vld [vmem:[%s106] ss:$8 sm:$0xf]
    %s108 = scalar_lea.vmem [#allocation0], 1
    %v109 = vld [vmem:[%s108] ss:$8 sm:$0xf0]
    %vm110 = vcmask 1047556
    %v111 = vsel %vm110, %v109, %v107
    %112 = vrot.lane.b32.xlu0 %v111, 16
    %v113 = vpop.permute.xlu0 %112
    %vm114 = vcmask 261248
    %115 = vst.msk [vmem:[%s1] sm:$0xff] %vm114, %v113
    %s116 = scalar_lea.vmem [#allocation0], 65
    %v117 = vld [vmem:[%s116] ss:$8 sm:$0xf]
    %118 = vrot.lane.b32.xlu0 %v117, 16
    %v119 = vpop.permute.xlu0 %118
    %vm120 = vcmask 261248
    %s121 = scalar_lea.vmem %s1, 8
    %122 = vst.msk [vmem:[%s121] sm:$0xf] %vm120, %v119

// kernel: tile.24
$region0: #{tile.24}
  %s0 = inlined_call_operand.vmem [shape: f32[4,12,128], index: 0, kind: input, shape index: {}]
  %s1 = inlined_call_operand.vmem [shape: f32[48,128], index: 1, kind: output, shape index: {}]
  %v2 = vld [vmem:[%s0] sm:$0xff]
  %3 = vst [vmem:[%s1] sm:$0xff] %v2
  %s4 = scalar_lea.vmem %s0, 8
  %v5 = vld [vmem:[%s4] sm:$0xf]
  %s6 = scalar_lea.vmem %s1, 8
  %7 = vst [vmem:[%s6] sm:$0xf] %v5
  %s8 = scalar_lea.vmem %s0, 16
  %v9 = vld [vmem:[%s8] sm:$0xff]
  %s10 = scalar_lea.vmem %s1, 12
  %11 = vst [vmem:[%s10] sm:$0xff] %v9
  %s12 = scalar_lea.vmem %s0, 24
  %v13 = vld [vmem:[%s12] sm:$0xf]
  %s14 = scalar_lea.vmem %s1, 20
  %15 = vst [vmem:[%s14] sm:$0xf] %v13
  %s16 = scalar_lea.vmem %s0, 32
  %v17 = vld [vmem:[%s16] sm:$0xff]
  %s18 = scalar_lea.vmem %s1, 24
  %19 = vst [vmem:[%s18] sm:$0xff] %v17
  %s20 = scalar_lea.vmem %s0, 40
  %v21 = vld [vmem:[%s20] sm:$0xf]
  %s22 = scalar_lea.vmem %s1, 32
  %23 = vst [vmem:[%s22] sm:$0xf] %v21
  %s24 = scalar_lea.vmem %s0, 48
  %v25 = vld [vmem:[%s24] sm:$0xff]
  %s26 = scalar_lea.vmem %s1, 36
  %27 = vst [vmem:[%s26] sm:$0xff] %v25
  %s28 = scalar_lea.vmem %s0, 56
  %v29 = vld [vmem:[%s28] sm:$0xf]
  %s30 = scalar_lea.vmem %s1, 44
  %31 = vst [vmem:[%s30] sm:$0xf] %v29

// kernel: duma_layer.1
$region0: #{duma_layer.1}
  #allocation0 [shape = 'u32[]', space=smem, size = 0x4, offset = 0x4, fixed_abs, tag = 'smem constant byte address 0x4 - core index']
  #allocation1 [shape = 'u32[144,128]{1,0:T(1,128)}', space=vmem, size = 0x12000, scoped, tag = 'internal scratch']
  %s0 = inlined_call_operand.vmem [shape: f32[48,128], index: 0, kind: input, shape index: {}]
  %s1 = inlined_call_operand.vmem [shape: f32[64,128], index: 1, kind: input, shape index: {}]
  %s2 = inlined_call_operand.vmem [shape: f32[128,96], index: 2, kind: input, shape index: {}]
  %s3 = inlined_call_operand.vmem [shape: f32[1,96], index: 3, kind: input, shape index: {}]
  %s4 = inlined_call_operand.vmem [shape: f32[128,96], index: 4, kind: input, shape index: {}]
  %s5 = inlined_call_operand.vmem [shape: f32[1,96], index: 5, kind: input, shape index: {}]
  %s6 = inlined_call_operand.vmem [shape: f32[64,96], index: 6, kind: input, shape index: {}]
  %s7 = inlined_call_operand.vmem [shape: f32[64,96], index: 7, kind: input, shape index: {}]
  %s8 = inlined_call_operand.vmem [shape: f32[12,64], index: 8, kind: input, shape index: {}]
  %s9 = inlined_call_operand.vmem [shape: f32[64,64], index: 9, kind: input, shape index: {}]
  %s10 = inlined_call_operand.vmem [shape: f32[48,96], index: 10, kind: input, shape index: {}]
  %s11 = inlined_call_operand.vmem [shape: f32[48,96], index: 11, kind: input, shape index: {}]
  %s12 = inlined_call_operand.vmem [shape: f32[16,48], index: 12, kind: input, shape index: {}]
  %s13 = inlined_call_operand.vmem [shape: f32[48,48], index: 13, kind: input, shape index: {}]
  %s14 = inlined_call_operand.vmem [shape: f32[96,128], index: 14, kind: input, shape index: {}]
  %s15 = inlined_call_operand.vmem [shape: f32[1,128], index: 15, kind: input, shape index: {}]
  %s16 = inlined_call_operand.vmem [shape: f32[96,128], index: 16, kind: input, shape index: {}]
  %s17 = inlined_call_operand.vmem [shape: f32[1,128], index: 17, kind: input, shape index: {}]
  %s18 = inlined_call_operand.vmem [shape: f32[12,128], index: 18, kind: output, shape index: {0}]
  %s19 = inlined_call_operand.vmem [shape: f32[16,128], index: 19, kind: output, shape index: {1}]
  %20 = xla_tuple %s18, %s19
  %s21 = sld [smem:[#allocation0]]
  $region90: #{duma_layer.1} parent=0
    _
  %s23 = ssub.s32 1, %s21
  %s24 = scalar_select 0, %s23, %s21
  // Predicated region
  $region2: #{duma_layer.1} parent=0 // pred_check
    _
  $region3: #{duma_layer.1} parent=0 // pred_check_branch
    %26 = sbr.rel (0) target = $region5
  $region4: #{duma_layer.1} parent=0 // pred_region
    _
  $region5: #{duma_layer.1} parent=0 // pred_fallthru
    _
  // Predicated region
  $region6: #{duma_layer.1} parent=0 // pred_check
    _
  $region7: #{duma_layer.1} parent=0 // pred_check_branch
    %28 = sbr.rel (0) target = $region9
  $region8: #{duma_layer.1} parent=0 // pred_region
    _
  $region9: #{duma_layer.1} parent=0 // pred_fallthru
    _
  // Predicated region
  $region10: #{duma_layer.1} parent=0 // pred_check
    _
  $region11: #{duma_layer.1} parent=0 // pred_check_branch
    %30 = sbr.rel (0) target = $region13
  $region12: #{duma_layer.1} parent=0 // pred_region
    _
  $region13: #{duma_layer.1} parent=0 // pred_fallthru
    _
  // Predicated region
  $region14: #{duma_layer.1} parent=0 // pred_check
    _
  $region15: #{duma_layer.1} parent=0 // pred_check_branch
    %32 = sbr.rel (0) target = $region17
  $region16: #{duma_layer.1} parent=0 // pred_region
    _
  $region17: #{duma_layer.1} parent=0 // pred_fallthru
    _
  // Predicated region
  $region18: #{duma_layer.1} parent=0 // pred_check
    _
  $region19: #{duma_layer.1} parent=0 // pred_check_branch
    %34 = sbr.rel (0) target = $region21
  $region20: #{duma_layer.1} parent=0 // pred_region
    _
  $region21: #{duma_layer.1} parent=0 // pred_fallthru
    _
  // Predicated region
  $region22: #{duma_layer.1} parent=0 // pred_check
    _
  $region23: #{duma_layer.1} parent=0 // pred_check_branch
    %36 = sbr.rel (0) target = $region25
  $region24: #{duma_layer.1} parent=0 // pred_region
    _
  $region25: #{duma_layer.1} parent=0 // pred_fallthru
    _
  // Predicated region
  $region26: #{duma_layer.1} parent=0 // pred_check
    _
  $region27: #{duma_layer.1} parent=0 // pred_check_branch
    %38 = sbr.rel (0) target = $region29
  $region28: #{duma_layer.1} parent=0 // pred_region
    _
  $region29: #{duma_layer.1} parent=0 // pred_fallthru
    _
  // Predicated region
  $region30: #{duma_layer.1} parent=0 // pred_check
    _
  $region31: #{duma_layer.1} parent=0 // pred_check_branch
    %40 = sbr.rel (0) target = $region33
  $region32: #{duma_layer.1} parent=0 // pred_region
    _
  $region33: #{duma_layer.1} parent=0 // pred_fallthru
    _
  // Predicated region
  $region34: #{duma_layer.1} parent=0 // pred_check
    _
  $region35: #{duma_layer.1} parent=0 // pred_check_branch
    %42 = sbr.rel (0) target = $region37
  $region36: #{duma_layer.1} parent=0 // pred_region
    _
  $region37: #{duma_layer.1} parent=0 // pred_fallthru
    _
  // Predicated region
  $region38: #{duma_layer.1} parent=0 // pred_check
    _
  $region39: #{duma_layer.1} parent=0 // pred_check_branch
    %44 = sbr.rel (0) target = $region41
  $region40: #{duma_layer.1} parent=0 // pred_region
    _
  $region41: #{duma_layer.1} parent=0 // pred_fallthru
    _
  // Predicated region
  $region42: #{duma_layer.1} parent=0 // pred_check
    _
  $region43: #{duma_layer.1} parent=0 // pred_check_branch
    %46 = sbr.rel (0) target = $region45
  $region44: #{duma_layer.1} parent=0 // pred_region
    _
  $region45: #{duma_layer.1} parent=0 // pred_fallthru
    _
  // Predicated region
  $region46: #{duma_layer.1} parent=0 // pred_check
    _
  $region47: #{duma_layer.1} parent=0 // pred_check_branch
    %48 = sbr.rel (0) target = $region49
  $region48: #{duma_layer.1} parent=0 // pred_region
    _
  $region49: #{duma_layer.1} parent=0 // pred_fallthru
    _
  // Predicated region
  $region50: #{duma_layer.1} parent=0 // pred_check
    _
  $region51: #{duma_layer.1} parent=0 // pred_check_branch
    %50 = sbr.rel (0) target = $region53
  $region52: #{duma_layer.1} parent=0 // pred_region
    _
  $region53: #{duma_layer.1} parent=0 // pred_fallthru
    _
  // Predicated region
  $region54: #{duma_layer.1} parent=0 // pred_check
    _
  $region55: #{duma_layer.1} parent=0 // pred_check_branch
    %52 = sbr.rel (0) target = $region57
  $region56: #{duma_layer.1} parent=0 // pred_region
    _
  $region57: #{duma_layer.1} parent=0 // pred_fallthru
    _
  // Predicated region
  $region58: #{duma_layer.1} parent=0 // pred_check
    _
  $region59: #{duma_layer.1} parent=0 // pred_check_branch
    %54 = sbr.rel (0) target = $region61
  $region60: #{duma_layer.1} parent=0 // pred_region
    _
  $region61: #{duma_layer.1} parent=0 // pred_fallthru
    _
  // Predicated region
  $region62: #{duma_layer.1} parent=0 // pred_check
    _
  $region63: #{duma_layer.1} parent=0 // pred_check_branch
    %56 = sbr.rel (0) target = $region65
  $region64: #{duma_layer.1} parent=0 // pred_region
    _
  $region65: #{duma_layer.1} parent=0 // pred_fallthru
    _
  // Predicated region
  $region66: #{duma_layer.1} parent=0 // pred_check
    _
  $region67: #{duma_layer.1} parent=0 // pred_check_branch
    %58 = sbr.rel (0) target = $region69
  $region68: #{duma_layer.1} parent=0 // pred_region
    _
  $region69: #{duma_layer.1} parent=0 // pred_fallthru
    _
  // Predicated region
  $region70: #{duma_layer.1} parent=0 // pred_check
    _
  $region71: #{duma_layer.1} parent=0 // pred_check_branch
    %60 = sbr.rel (0) target = $region73
  $region72: #{duma_layer.1} parent=0 // pred_region
    _
  $region73: #{duma_layer.1} parent=0 // pred_fallthru
    _
  %v61 = vld [vmem:[%s0] sm:$0xff]
  %v62 = vld [vmem:[%s0 + $0x8] sm:$0xff]
  %v63 = vld [vmem:[%s0 + $0x10] sm:$0xff]
  %v64 = vld [vmem:[%s0 + $0x18] sm:$0xff]
  %v65 = vld [vmem:[%s0 + $0x20] sm:$0xff]
  %v66 = vld [vmem:[%s0 + $0x28] sm:$0xff]
  %v67 = vld [vmem:[%s2] sm:$0xff]
  %v68 = vld [vmem:[%s2 + $0x8] sm:$0xff]
  %v69 = vld [vmem:[%s2 + $0x10] sm:$0xff]
  %v70 = vld [vmem:[%s2 + $0x18] sm:$0xff]
  %v71 = vld [vmem:[%s2 + $0x20] sm:$0xff]
  %v72 = vld [vmem:[%s2 + $0x28] sm:$0xff]
  %v73 = vld [vmem:[%s2 + $0x30] sm:$0xff]
  %v74 = vld [vmem:[%s2 + $0x38] sm:$0xff]
  %v75 = vld [vmem:[%s2 + $0x40] sm:$0xff]
  %v76 = vld [vmem:[%s2 + $0x48] sm:$0xff]
  %v77 = vld [vmem:[%s2 + $0x50] sm:$0xff]
  %v78 = vld [vmem:[%s2 + $0x58] sm:$0xff]
  %v79 = vld [vmem:[%s2 + $0x60] sm:$0xff]
  %v80 = vld [vmem:[%s2 + $0x68] sm:$0xff]
  %v81 = vld [vmem:[%s2 + $0x70] sm:$0xff]
  %v82 = vld [vmem:[%s2 + $0x78] sm:$0xff]
  %v83 = vld [vmem:[%s3] sm:$0x1]
  %v85 = vlaneseq
  %v86 = vshrl.u32 %v85, 7
  %v87 = vsub.s32 0, %v86
  %v88 = vrot.slane %v83, %v87
  %90 = vmatprep.subr.mxu0 0.0
  %91 = vmatpush1.msra.mxu0 %v82
  %92 = vmatprep.subr.mxu0 0.0
  %93 = vmatpush1.msra.mxu0 %v81
  %94 = vmatprep.subr.mxu0 0.0
  %95 = vmatpush1.msra.mxu0 %v80
  %96 = vmatprep.subr.mxu0 0.0
  %97 = vmatpush1.msra.mxu0 %v79
  %98 = vmatprep.subr.mxu0 0.0
  %99 = vmatpush1.msra.mxu0 %v78
  %100 = vmatprep.subr.mxu0 0.0
  %101 = vmatpush1.msra.mxu0 %v77
  %102 = vmatprep.subr.mxu0 0.0
  %103 = vmatpush1.msra.mxu0 %v76
  %104 = vmatprep.subr.mxu0 0.0
  %105 = vmatpush1.msra.mxu0 %v75
  %106 = vmatprep.subr.mxu0 0.0
  %107 = vmatpush1.msra.mxu0 %v74
  %108 = vmatprep.subr.mxu0 0.0
  %109 = vmatpush1.msra.mxu0 %v73
  %110 = vmatprep.subr.mxu0 0.0
  %111 = vmatpush1.msra.mxu0 %v72
  %112 = vmatprep.subr.mxu0 0.0
  %113 = vmatpush1.msra.mxu0 %v71
  %114 = vmatprep.subr.mxu0 0.0
  %115 = vmatpush1.msra.mxu0 %v70
  %116 = vmatprep.subr.mxu0 0.0
  %117 = vmatpush1.msra.mxu0 %v69
  %118 = vmatprep.subr.mxu0 0.0
  %119 = vmatpush1.msra.mxu0 %v68
  %120 = vmatprep.subr.mxu0 0.0
  %121 = vmatpush1.msra.mxu0 %v67
  %122 = vmatprep.subr.mxu0 0.0
  %123 = vmatpush2.msra.mxu0 0.0
  %124 = vmatprep.subr.mxu0 0.0
  %125 = vmatpush2.msra.mxu0 0.0
  %126 = vmatprep.subr.mxu0 0.0
  %127 = vmatpush2.msra.mxu0 0.0
  %128 = vmatprep.subr.mxu0 0.0
  %129 = vmatpush2.msra.mxu0 0.0
  %130 = vmatprep.subr.mxu0 0.0
  %131 = vmatpush2.msra.mxu0 0.0
  %132 = vmatprep.subr.mxu0 0.0
  %133 = vmatpush2.msra.mxu0 0.0
  %134 = vmatprep.subr.mxu0 0.0
  %135 = vmatpush2.msra.mxu0 0.0
  %136 = vmatprep.subr.mxu0 0.0
  %137 = vmatpush2.msra.mxu0 0.0
  %138 = vmatprep.subr.mxu0 0.0
  %139 = vmatpush2.msra.mxu0 0.0
  %140 = vmatprep.subr.mxu0 0.0
  %141 = vmatpush2.msra.mxu0 0.0
  %142 = vmatprep.subr.mxu0 0.0
  %143 = vmatpush2.msra.mxu0 0.0
  %144 = vmatprep.subr.mxu0 0.0
  %145 = vmatpush2.msra.mxu0 0.0
  %146 = vmatprep.subr.mxu0 0.0
  %147 = vmatpush2.msra.mxu0 0.0
  %148 = vmatprep.subr.mxu0 0.0
  %149 = vmatpush2.msra.mxu0 0.0
  %150 = vmatprep.subr.mxu0 0.0
  %151 = vmatpush2.msra.mxu0 0.0
  %152 = vmatprep.subr.mxu0 0.0
  %153 = vmatpush2.msra.mxu0 0.0
  %154 = vmatprep.mubr.f32.mxu0 0.0
  %155 = vmatmul.mubr.f32.gmra.mxu0 %v61
  %v156 = vpop.f32.mrf.mxu0
  %v157 = vadd.f32 %v88, %v156
  %v158 = vpop.f32.mrf.mxu0
  %159 = vmatprep.mubr.f32.mxu0 0.0
  %160 = vmatmul.mubr.f32.gmra.mxu0 %v62
  %v161 = vpop.f32.mrf.mxu0
  %v162 = vadd.f32 %v88, %v161
  %v163 = vpop.f32.mrf.mxu0
  %164 = vmatprep.mubr.f32.mxu0 0.0
  %165 = vmatmul.mubr.f32.gmra.mxu0 %v63
  %v166 = vpop.f32.mrf.mxu0
  %v167 = vadd.f32 %v88, %v166
  %v168 = vpop.f32.mrf.mxu0
  %169 = vmatprep.mubr.f32.mxu0 0.0
  %170 = vmatmul.mubr.f32.gmra.mxu0 %v64
  %v171 = vpop.f32.mrf.mxu0
  %v172 = vadd.f32 %v88, %v171
  %v173 = vpop.f32.mrf.mxu0
  %174 = vmatprep.mubr.f32.mxu0 0.0
  %175 = vmatmul.mubr.f32.gmra.mxu0 %v65
  %v176 = vpop.f32.mrf.mxu0
  %v177 = vadd.f32 %v88, %v176
  %v178 = vpop.f32.mrf.mxu0
  %179 = vmatprep.mubr.f32.mxu0 0.0
  %180 = vmatmul.mubr.f32.gmra.mxu0 %v66
  %v181 = vpop.f32.mrf.mxu0
  %v182 = vadd.f32 %v88, %v181
  %v183 = vpop.f32.mrf.mxu0
  %184 = vdwg.mxu0
  %v185 = vld [vmem:[%s1] sm:$0xff]
  %v186 = vld [vmem:[%s1 + $0x8] sm:$0xff]
  %v187 = vld [vmem:[%s1 + $0x10] sm:$0xff]
  %v188 = vld [vmem:[%s1 + $0x18] sm:$0xff]
  %v189 = vld [vmem:[%s1 + $0x20] sm:$0xff]
  %v190 = vld [vmem:[%s1 + $0x28] sm:$0xff]
  %v191 = vld [vmem:[%s1 + $0x30] sm:$0xff]
  %v192 = vld [vmem:[%s1 + $0x38] sm:$0xff]
  %v193 = vld [vmem:[%s4] sm:$0xff]
  %v194 = vld [vmem:[%s4 + $0x8] sm:$0xff]
  %v195 = vld [vmem:[%s4 + $0x10] sm:$0xff]
  %v196 = vld [vmem:[%s4 + $0x18] sm:$0xff]
  %v197 = vld [vmem:[%s4 + $0x20] sm:$0xff]
  %v198 = vld [vmem:[%s4 + $0x28] sm:$0xff]
  %v199 = vld [vmem:[%s4 + $0x30] sm:$0xff]
  %v200 = vld [vmem:[%s4 + $0x38] sm:$0xff]
  %v201 = vld [vmem:[%s4 + $0x40] sm:$0xff]
  %v202 = vld [vmem:[%s4 + $0x48] sm:$0xff]
  %v203 = vld [vmem:[%s4 + $0x50] sm:$0xff]
  %v204 = vld [vmem:[%s4 + $0x58] sm:$0xff]
  %v205 = vld [vmem:[%s4 + $0x60] sm:$0xff]
  %v206 = vld [vmem:[%s4 + $0x68] sm:$0xff]
  %v207 = vld [vmem:[%s4 + $0x70] sm:$0xff]
  %v208 = vld [vmem:[%s4 + $0x78] sm:$0xff]
  %v209 = vld [vmem:[%s5] sm:$0x1]
  %v211 = vlaneseq
  %v212 = vshrl.u32 %v211, 7
  %v213 = vsub.s32 0, %v212
  %v214 = vrot.slane %v209, %v213
  %216 = vmatprep.subr.mxu0 0.0
  %217 = vmatpush1.msra.mxu0 %v208
  %218 = vmatprep.subr.mxu0 0.0
  %219 = vmatpush1.msra.mxu0 %v207
  %220 = vmatprep.subr.mxu0 0.0
  %221 = vmatpush1.msra.mxu0 %v206
  %222 = vmatprep.subr.mxu0 0.0
  %223 = vmatpush1.msra.mxu0 %v205
  %224 = vmatprep.subr.mxu0 0.0
  %225 = vmatpush1.msra.mxu0 %v204
  %226 = vmatprep.subr.mxu0 0.0
  %227 = vmatpush1.msra.mxu0 %v203
  %228 = vmatprep.subr.mxu0 0.0
  %229 = vmatpush1.msra.mxu0 %v202
  %230 = vmatprep.subr.mxu0 0.0
  %231 = vmatpush1.msra.mxu0 %v201
  %232 = vmatprep.subr.mxu0 0.0
  %233 = vmatpush1.msra.mxu0 %v200
  %234 = vmatprep.subr.mxu0 0.0
  %235 = vmatpush1.msra.mxu0 %v199
  %236 = vmatprep.subr.mxu0 0.0
  %237 = vmatpush1.msra.mxu0 %v198
  %238 = vmatprep.subr.mxu0 0.0
  %239 = vmatpush1.msra.mxu0 %v197
  %240 = vmatprep.subr.mxu0 0.0
  %241 = vmatpush1.msra.mxu0 %v196
  %242 = vmatprep.subr.mxu0 0.0
  %243 = vmatpush1.msra.mxu0 %v195
  %244 = vmatprep.subr.mxu0 0.0
  %245 = vmatpush1.msra.mxu0 %v194
  %246 = vmatprep.subr.mxu0 0.0
  %247 = vmatpush1.msra.mxu0 %v193
  %248 = vmatprep.subr.mxu0 0.0
  %249 = vmatpush2.msra.mxu0 0.0
  %250 = vmatprep.subr.mxu0 0.0
  %251 = vmatpush2.msra.mxu0 0.0
  %252 = vmatprep.subr.mxu0 0.0
  %253 = vmatpush2.msra.mxu0 0.0
  %254 = vmatprep.subr.mxu0 0.0
  %255 = vmatpush2.msra.mxu0 0.0
  %256 = vmatprep.subr.mxu0 0.0
  %257 = vmatpush2.msra.mxu0 0.0
  %258 = vmatprep.subr.mxu0 0.0
  %259 = vmatpush2.msra.mxu0 0.0
  %260 = vmatprep.subr.mxu0 0.0
  %261 = vmatpush2.msra.mxu0 0.0
  %262 = vmatprep.subr.mxu0 0.0
  %263 = vmatpush2.msra.mxu0 0.0
  %264 = vmatprep.subr.mxu0 0.0
  %265 = vmatpush2.msra.mxu0 0.0
  %266 = vmatprep.subr.mxu0 0.0
  %267 = vmatpush2.msra.mxu0 0.0
  %268 = vmatprep.subr.mxu0 0.0
  %269 = vmatpush2.msra.mxu0 0.0
  %270 = vmatprep.subr.mxu0 0.0
  %271 = vmatpush2.msra.mxu0 0.0
  %272 = vmatprep.subr.mxu0 0.0
  %273 = vmatpush2.msra.mxu0 0.0
  %274 = vmatprep.subr.mxu0 0.0
  %275 = vmatpush2.msra.mxu0 0.0
  %276 = vmatprep.subr.mxu0 0.0
  %277 = vmatpush2.msra.mxu0 0.0
  %278 = vmatprep.subr.mxu0 0.0
  %279 = vmatpush2.msra.mxu0 0.0
  %280 = vmatprep.mubr.f32.mxu0 0.0
  %281 = vmatmul.mubr.f32.gmra.mxu0 %v185
  %v282 = vpop.f32.mrf.mxu0
  %v283 = vadd.f32 %v214, %v282
  %v284 = vpop.f32.mrf.mxu0
  %285 = vmatprep.mubr.f32.mxu0 0.0
  %286 = vmatmul.mubr.f32.gmra.mxu0 %v186
  %v287 = vpop.f32.mrf.mxu0
  %v288 = vadd.f32 %v214, %v287
  %v289 = vpop.f32.mrf.mxu0
  %290 = vmatprep.mubr.f32.mxu0 0.0
  %291 = vmatmul.mubr.f32.gmra.mxu0 %v187
  %v292 = vpop.f32.mrf.mxu0
  %v293 = vadd.f32 %v214, %v292
  %v294 = vpop.f32.mrf.mxu0
  %295 = vmatprep.mubr.f32.mxu0 0.0
  %296 = vmatmul.mubr.f32.gmra.mxu0 %v188
  %v297 = vpop.f32.mrf.mxu0
  %v298 = vadd.f32 %v214, %v297
  %v299 = vpop.f32.mrf.mxu0
  %300 = vmatprep.mubr.f32.mxu0 0.0
  %301 = vmatmul.mubr.f32.gmra.mxu0 %v189
  %v302 = vpop.f32.mrf.mxu0
  %v303 = vadd.f32 %v214, %v302
  %v304 = vpop.f32.mrf.mxu0
  %305 = vmatprep.mubr.f32.mxu0 0.0
  %306 = vmatmul.mubr.f32.gmra.mxu0 %v190
  %v307 = vpop.f32.mrf.mxu0
  %v308 = vadd.f32 %v214, %v307
  %v309 = vpop.f32.mrf.mxu0
  %310 = vmatprep.mubr.f32.mxu0 0.0
  %311 = vmatmul.mubr.f32.gmra.mxu0 %v191
  %v312 = vpop.f32.mrf.mxu0
  %v313 = vadd.f32 %v214, %v312
  %v314 = vpop.f32.mrf.mxu0
  %315 = vmatprep.mubr.f32.mxu0 0.0
  %316 = vmatmul.mubr.f32.gmra.mxu0 %v192
  %v317 = vpop.f32.mrf.mxu0
  %v318 = vadd.f32 %v214, %v317
  %v319 = vpop.f32.mrf.mxu0
  %320 = vdwg.mxu0
  %v321 = vld [vmem:[%s6] sm:$0xff]
  %v322 = vld [vmem:[%s6 + $0x8] sm:$0xff]
  %v323 = vld [vmem:[%s6 + $0x10] sm:$0xff]
  %v324 = vld [vmem:[%s6 + $0x18] sm:$0xff]
  %v325 = vld [vmem:[%s6 + $0x20] sm:$0xff]
  %v326 = vld [vmem:[%s6 + $0x28] sm:$0xff]
  %v327 = vld [vmem:[%s6 + $0x30] sm:$0xff]
  %v328 = vld [vmem:[%s6 + $0x38] sm:$0xff]
  %v329 = vld [vmem:[%s7] sm:$0xff]
  %v330 = vld [vmem:[%s7 + $0x8] sm:$0xff]
  %v331 = vld [vmem:[%s7 + $0x10] sm:$0xff]
  %v332 = vld [vmem:[%s7 + $0x18] sm:$0xff]
  %v333 = vld [vmem:[%s7 + $0x20] sm:$0xff]
  %v334 = vld [vmem:[%s7 + $0x28] sm:$0xff]
  %v335 = vld [vmem:[%s7 + $0x30] sm:$0xff]
  %v336 = vld [vmem:[%s7 + $0x38] sm:$0xff]
  %v337 = vld [vmem:[%s8] sm:$0xff]
  %v338 = vld [vmem:[%s8 + $0x8] sm:$0xf]
  %v339 = vld [vmem:[%s9] sm:$0xff]
  %v340 = vld [vmem:[%s9 + $0x8] sm:$0xff]
  %v341 = vld [vmem:[%s9 + $0x10] sm:$0xff]
  %v342 = vld [vmem:[%s9 + $0x18] sm:$0xff]
  %v343 = vld [vmem:[%s9 + $0x20] sm:$0xff]
  %v344 = vld [vmem:[%s9 + $0x28] sm:$0xff]
  %v345 = vld [vmem:[%s9 + $0x30] sm:$0xff]
  %v346 = vld [vmem:[%s9 + $0x38] sm:$0xff]
  %v347 = vmul.f32 %v283, %v321
  %v348 = vmul.f32 %v288, %v322
  %v349 = vmul.f32 %v293, %v323
  %v350 = vmul.f32 %v298, %v324
  %v351 = vmul.f32 %v303, %v325
  %v352 = vmul.f32 %v308, %v326
  %v353 = vmul.f32 %v313, %v327
  %v354 = vmul.f32 %v318, %v328
  %v355 = vmul.f32 %v283, %v329
  %v356 = vmul.f32 %v288, %v330
  %v357 = vmul.f32 %v293, %v331
  %v358 = vmul.f32 %v298, %v332
  %v359 = vmul.f32 %v303, %v333
  %v360 = vmul.f32 %v308, %v334
  %v361 = vmul.f32 %v313, %v335
  %v362 = vmul.f32 %v318, %v336
  %vm363 = vcmask 785408
  %v365 = vsel %vm363, %v157, 0
  %v368 = vsel %vm363, %v162, 0
  %v371 = vsel %vm363, %v347, 0
  %v374 = vsel %vm363, %v348, 0
  %v377 = vsel %vm363, %v349, 0
  %v380 = vsel %vm363, %v350, 0
  %v383 = vsel %vm363, %v351, 0
  %v386 = vsel %vm363, %v352, 0
  %v389 = vsel %vm363, %v353, 0
  %v392 = vsel %vm363, %v354, 0
  %394 = vmatprep.subr.mxu0 0.0
  %395 = vmatpush1.xpose.msra.mxu0 0.0
  %396 = vmatprep.subr.mxu0 0.0
  %397 = vmatpush1.xpose.msra.mxu0 0.0
  %398 = vmatprep.subr.mxu0 0.0
  %399 = vmatpush1.xpose.msra.mxu0 0.0
  %400 = vmatprep.subr.mxu0 0.0
  %401 = vmatpush1.xpose.msra.mxu0 0.0
  %402 = vmatprep.subr.mxu0 0.0
  %403 = vmatpush1.xpose.msra.mxu0 0.0
  %404 = vmatprep.subr.mxu0 0.0
  %405 = vmatpush1.xpose.msra.mxu0 0.0
  %406 = vmatprep.subr.mxu0 0.0
  %407 = vmatpush1.xpose.msra.mxu0 0.0
  %408 = vmatprep.subr.mxu0 0.0
  %409 = vmatpush1.xpose.msra.mxu0 0.0
  %410 = vmatprep.subr.mxu0 0.0
  %411 = vmatpush1.xpose.msra.mxu0 %v392
  %412 = vmatprep.subr.mxu0 0.0
  %413 = vmatpush1.xpose.msra.mxu0 %v389
  %414 = vmatprep.subr.mxu0 0.0
  %415 = vmatpush1.xpose.msra.mxu0 %v386
  %416 = vmatprep.subr.mxu0 0.0
  %417 = vmatpush1.xpose.msra.mxu0 %v383
  %418 = vmatprep.subr.mxu0 0.0
  %419 = vmatpush1.xpose.msra.mxu0 %v380
  %420 = vmatprep.subr.mxu0 0.0
  %421 = vmatpush1.xpose.msra.mxu0 %v377
  %422 = vmatprep.subr.mxu0 0.0
  %423 = vmatpush1.xpose.msra.mxu0 %v374
  %424 = vmatprep.subr.mxu0 0.0
  %425 = vmatpush1.xpose.msra.mxu0 %v371
  %426 = vmatprep.subr.mxu0 0.0
  %427 = vmatpush2.xpose.msra.mxu0 0.0
  %428 = vmatprep.subr.mxu0 0.0
  %429 = vmatpush2.xpose.msra.mxu0 0.0
  %430 = vmatprep.subr.mxu0 0.0
  %431 = vmatpush2.xpose.msra.mxu0 0.0
  %432 = vmatprep.subr.mxu0 0.0
  %433 = vmatpush2.xpose.msra.mxu0 0.0
  %434 = vmatprep.subr.mxu0 0.0
  %435 = vmatpush2.xpose.msra.mxu0 0.0
  %436 = vmatprep.subr.mxu0 0.0
  %437 = vmatpush2.xpose.msra.mxu0 0.0
  %438 = vmatprep.subr.mxu0 0.0
  %439 = vmatpush2.xpose.msra.mxu0 0.0
  %440 = vmatprep.subr.mxu0 0.0
  %441 = vmatpush2.xpose.msra.mxu0 0.0
  %442 = vmatprep.subr.mxu0 0.0
  %443 = vmatpush2.xpose.msra.mxu0 0.0
  %444 = vmatprep.subr.mxu0 0.0
  %445 = vmatpush2.xpose.msra.mxu0 0.0
  %446 = vmatprep.subr.mxu0 0.0
  %447 = vmatpush2.xpose.msra.mxu0 0.0
  %448 = vmatprep.subr.mxu0 0.0
  %449 = vmatpush2.xpose.msra.mxu0 0.0
  %450 = vmatprep.subr.mxu0 0.0
  %451 = vmatpush2.xpose.msra.mxu0 0.0
  %452 = vmatprep.subr.mxu0 0.0
  %453 = vmatpush2.xpose.msra.mxu0 0.0
  %454 = vmatprep.subr.mxu0 0.0
  %455 = vmatpush2.xpose.msra.mxu0 0.0
  %456 = vmatprep.subr.mxu0 0.0
  %457 = vmatpush2.xpose.msra.mxu0 0.0
  %458 = vmatprep.mubr.f32.mxu0 0.0
  %459 = vmatmul.mubr.f32.gmra.mxu0 %v365
  %v460 = vpop.f32.mrf.mxu0
  %v461 = vadd.f32 %v337, %v460
  %v462 = vpop.f32.mrf.mxu0
  %463 = vmatprep.mubr.f32.mxu0 0.0
  %464 = vmatmul.mubr.f32.gmra.mxu0 %v368
  %v465 = vpop.f32.mrf.mxu0
  %v466 = vadd.f32 %v338, %v465
  %v467 = vpop.f32.mrf.mxu0
  %468 = vdwg.mxu0
  %vm469 = vcmask 523264
  %v470 = vsel %vm469, %v461, -inf
  %471 = vmax.xlane.f32.xlu0 %v470
  %v472 = vpop.xlane.xlu0 %471
  %vm473 = vcmask 519168
  %v474 = vsel %vm473, %v466, -inf
  %475 = vmax.xlane.f32.xlu0 %v474
  %v476 = vpop.xlane.xlu0 %475
  %v477 = vsub.f32 %v461, %v472
  %v478 = vsub.f32 %v466, %v476
  %v479 = vmul.f32 %v477, 1.442695
  %v480 = vpow.pop %v479
  %v481 = vmul.f32 %v478, 1.442695
  %v482 = vpow.pop %v481
  %v484 = vsel %vm469, %v480, 0
  %v487 = vsel %vm469, %v482, 0
  %489 = vmatprep.subr.mxu0 0.0
  %490 = vmatpush1.msra.mxu0 0.0
  %491 = vmatprep.subr.mxu0 0.0
  %492 = vmatpush1.msra.mxu0 0.0
  %493 = vmatprep.subr.mxu0 0.0
  %494 = vmatpush1.msra.mxu0 0.0
  %495 = vmatprep.subr.mxu0 0.0
  %496 = vmatpush1.msra.mxu0 0.0
  %497 = vmatprep.subr.mxu0 0.0
  %498 = vmatpush1.msra.mxu0 0.0
  %499 = vmatprep.subr.mxu0 0.0
  %500 = vmatpush1.msra.mxu0 0.0
  %501 = vmatprep.subr.mxu0 0.0
  %502 = vmatpush1.msra.mxu0 0.0
  %503 = vmatprep.subr.mxu0 0.0
  %504 = vmatpush1.msra.mxu0 0.0
  %505 = vmatprep.subr.mxu0 0.0
  %506 = vmatpush1.msra.mxu0 %v346
  %507 = vmatprep.subr.mxu0 0.0
  %508 = vmatpush1.msra.mxu0 %v345
  %509 = vmatprep.subr.mxu0 0.0
  %510 = vmatpush1.msra.mxu0 %v344
  %511 = vmatprep.subr.mxu0 0.0
  %512 = vmatpush1.msra.mxu0 %v343
  %513 = vmatprep.subr.mxu0 0.0
  %514 = vmatpush1.msra.mxu0 %v342
  %515 = vmatprep.subr.mxu0 0.0
  %516 = vmatpush1.msra.mxu0 %v341
  %517 = vmatprep.subr.mxu0 0.0
  %518 = vmatpush1.msra.mxu0 %v340
  %519 = vmatprep.subr.mxu0 0.0
  %520 = vmatpush1.msra.mxu0 %v339
  %521 = vmatprep.subr.mxu0 0.0
  %522 = vmatpush2.msra.mxu0 0.0
  %523 = vmatprep.subr.mxu0 0.0
  %524 = vmatpush2.msra.mxu0 0.0
  %525 = vmatprep.subr.mxu0 0.0
  %526 = vmatpush2.msra.mxu0 0.0
  %527 = vmatprep.subr.mxu0 0.0
  %528 = vmatpush2.msra.mxu0 0.0
  %529 = vmatprep.subr.mxu0 0.0
  %530 = vmatpush2.msra.mxu0 0.0
  %531 = vmatprep.subr.mxu0 0.0
  %532 = vmatpush2.msra.mxu0 0.0
  %533 = vmatprep.subr.mxu0 0.0
  %534 = vmatpush2.msra.mxu0 0.0
  %535 = vmatprep.subr.mxu0 0.0
  %536 = vmatpush2.msra.mxu0 0.0
  %537 = vmatprep.subr.mxu0 0.0
  %538 = vmatpush2.msra.mxu0 0.0
  %539 = vmatprep.subr.mxu0 0.0
  %540 = vmatpush2.msra.mxu0 0.0
  %541 = vmatprep.subr.mxu0 0.0
  %542 = vmatpush2.msra.mxu0 0.0
  %543 = vmatprep.subr.mxu0 0.0
  %544 = vmatpush2.msra.mxu0 0.0
  %545 = vmatprep.subr.mxu0 0.0
  %546 = vmatpush2.msra.mxu0 0.0
  %547 = vmatprep.subr.mxu0 0.0
  %548 = vmatpush2.msra.mxu0 0.0
  %549 = vmatprep.subr.mxu0 0.0
  %550 = vmatpush2.msra.mxu0 0.0
  %551 = vmatprep.subr.mxu0 0.0
  %552 = vmatpush2.msra.mxu0 0.0
  %553 = vmatprep.mubr.f32.mxu0 0.0
  %554 = vmatmul.mubr.f32.gmra.mxu0 %v484
  %v555 = vpop.f32.mrf.mxu0
  %v556 = vadd.f32 0.0, %v555
  %v557 = vpop.f32.mrf.mxu0
  %558 = vmatprep.mubr.f32.mxu0 0.0
  %559 = vmatmul.mubr.f32.gmra.mxu0 %v487
  %v560 = vpop.f32.mrf.mxu0
  %v561 = vadd.f32 0.0, %v560
  %v562 = vpop.f32.mrf.mxu0
  %563 = vdwg.mxu0
  %v564 = vrcp.pop %v556
  %v565 = vmul.f32 %v480, %v564
  %v566 = vrcp.pop %v561
  %v567 = vmul.f32 %v482, %v566
  %v569 = vsel %vm469, %v565, 0
  %v572 = vsel %vm469, %v567, 0
  %574 = vmatprep.subr.mxu0 0.0
  %575 = vmatpush1.msra.mxu0 0.0
  %576 = vmatprep.subr.mxu0 0.0
  %577 = vmatpush1.msra.mxu0 0.0
  %578 = vmatprep.subr.mxu0 0.0
  %579 = vmatpush1.msra.mxu0 0.0
  %580 = vmatprep.subr.mxu0 0.0
  %581 = vmatpush1.msra.mxu0 0.0
  %582 = vmatprep.subr.mxu0 0.0
  %583 = vmatpush1.msra.mxu0 0.0
  %584 = vmatprep.subr.mxu0 0.0
  %585 = vmatpush1.msra.mxu0 0.0
  %586 = vmatprep.subr.mxu0 0.0
  %587 = vmatpush1.msra.mxu0 0.0
  %588 = vmatprep.subr.mxu0 0.0
  %589 = vmatpush1.msra.mxu0 0.0
  %590 = vmatprep.subr.mxu0 0.0
  %591 = vmatpush1.msra.mxu0 %v362
  %592 = vmatprep.subr.mxu0 0.0
  %593 = vmatpush1.msra.mxu0 %v361
  %594 = vmatprep.subr.mxu0 0.0
  %595 = vmatpush1.msra.mxu0 %v360
  %596 = vmatprep.subr.mxu0 0.0
  %597 = vmatpush1.msra.mxu0 %v359
  %598 = vmatprep.subr.mxu0 0.0
  %599 = vmatpush1.msra.mxu0 %v358
  %600 = vmatprep.subr.mxu0 0.0
  %601 = vmatpush1.msra.mxu0 %v357
  %602 = vmatprep.subr.mxu0 0.0
  %603 = vmatpush1.msra.mxu0 %v356
  %604 = vmatprep.subr.mxu0 0.0
  %605 = vmatpush1.msra.mxu0 %v355
  %606 = vmatprep.subr.mxu0 0.0
  %607 = vmatpush2.msra.mxu0 0.0
  %608 = vmatprep.subr.mxu0 0.0
  %609 = vmatpush2.msra.mxu0 0.0
  %610 = vmatprep.subr.mxu0 0.0
  %611 = vmatpush2.msra.mxu0 0.0
  %612 = vmatprep.subr.mxu0 0.0
  %613 = vmatpush2.msra.mxu0 0.0
  %614 = vmatprep.subr.mxu0 0.0
  %615 = vmatpush2.msra.mxu0 0.0
  %616 = vmatprep.subr.mxu0 0.0
  %617 = vmatpush2.msra.mxu0 0.0
  %618 = vmatprep.subr.mxu0 0.0
  %619 = vmatpush2.msra.mxu0 0.0
  %620 = vmatprep.subr.mxu0 0.0
  %621 = vmatpush2.msra.mxu0 0.0
  %622 = vmatprep.subr.mxu0 0.0
  %623 = vmatpush2.msra.mxu0 0.0
  %624 = vmatprep.subr.mxu0 0.0
  %625 = vmatpush2.msra.mxu0 0.0
  %626 = vmatprep.subr.mxu0 0.0
  %627 = vmatpush2.msra.mxu0 0.0
  %628 = vmatprep.subr.mxu0 0.0
  %629 = vmatpush2.msra.mxu0 0.0
  %630 = vmatprep.subr.mxu0 0.0
  %631 = vmatpush2.msra.mxu0 0.0
  %632 = vmatprep.subr.mxu0 0.0
  %633 = vmatpush2.msra.mxu0 0.0
  %634 = vmatprep.subr.mxu0 0.0
  %635 = vmatpush2.msra.mxu0 0.0
  %636 = vmatprep.subr.mxu0 0.0
  %637 = vmatpush2.msra.mxu0 0.0
  %638 = vmatprep.mubr.f32.mxu0 0.0
  %639 = vmatmul.mubr.f32.gmra.mxu0 %v569
  %v640 = vpop.f32.mrf.mxu0
  %v641 = vadd.f32 0.0, %v640
  %v642 = vpop.f32.mrf.mxu0
  %643 = vmatprep.mubr.f32.mxu0 0.0
  %644 = vmatmul.mubr.f32.gmra.mxu0 %v572
  %v645 = vpop.f32.mrf.mxu0
  %v646 = vadd.f32 0.0, %v645
  %v647 = vpop.f32.mrf.mxu0
  %648 = vdwg.mxu0
  %v649 = vld [vmem:[%s14] sm:$0xff]
  %v650 = vld [vmem:[%s14 + $0x8] sm:$0xff]
  %v651 = vld [vmem:[%s14 + $0x10] sm:$0xff]
  %v652 = vld [vmem:[%s14 + $0x18] sm:$0xff]
  %v653 = vld [vmem:[%s14 + $0x20] sm:$0xff]
  %v654 = vld [vmem:[%s14 + $0x28] sm:$0xff]
  %v655 = vld [vmem:[%s14 + $0x30] sm:$0xff]
  %v656 = vld [vmem:[%s14 + $0x38] sm:$0xff]
  %v657 = vld [vmem:[%s14 + $0x40] sm:$0xff]
  %v658 = vld [vmem:[%s14 + $0x48] sm:$0xff]
  %v659 = vld [vmem:[%s14 + $0x50] sm:$0xff]
  %v660 = vld [vmem:[%s14 + $0x58] sm:$0xff]
  %v661 = vld [vmem:[%s15] sm:$0x1]
  %v663 = vlaneseq
  %v664 = vshrl.u32 %v663, 7
  %v665 = vsub.s32 0, %v664
  %v666 = vrot.slane %v661, %v665
  %v669 = vsel %vm363, %v641, 0
  %v672 = vsel %vm363, %v646, 0
  %674 = vmatprep.subr.mxu0 0.0
  %675 = vmatpush1.msra.mxu0 0.0
  %676 = vmatprep.subr.mxu0 0.0
  %677 = vmatpush1.msra.mxu0 0.0
  %678 = vmatprep.subr.mxu0 0.0
  %679 = vmatpush1.msra.mxu0 0.0
  %680 = vmatprep.subr.mxu0 0.0
  %681 = vmatpush1.msra.mxu0 0.0
  %682 = vmatprep.subr.mxu0 0.0
  %683 = vmatpush1.msra.mxu0 %v660
  %684 = vmatprep.subr.mxu0 0.0
  %685 = vmatpush1.msra.mxu0 %v659
  %686 = vmatprep.subr.mxu0 0.0
  %687 = vmatpush1.msra.mxu0 %v658
  %688 = vmatprep.subr.mxu0 0.0
  %689 = vmatpush1.msra.mxu0 %v657
  %690 = vmatprep.subr.mxu0 0.0
  %691 = vmatpush1.msra.mxu0 %v656
  %692 = vmatprep.subr.mxu0 0.0
  %693 = vmatpush1.msra.mxu0 %v655
  %694 = vmatprep.subr.mxu0 0.0
  %695 = vmatpush1.msra.mxu0 %v654
  %696 = vmatprep.subr.mxu0 0.0
  %697 = vmatpush1.msra.mxu0 %v653
  %698 = vmatprep.subr.mxu0 0.0
  %699 = vmatpush1.msra.mxu0 %v652
  %700 = vmatprep.subr.mxu0 0.0
  %701 = vmatpush1.msra.mxu0 %v651
  %702 = vmatprep.subr.mxu0 0.0
  %703 = vmatpush1.msra.mxu0 %v650
  %704 = vmatprep.subr.mxu0 0.0
  %705 = vmatpush1.msra.mxu0 %v649
  %706 = vmatprep.subr.mxu0 0.0
  %707 = vmatpush2.msra.mxu0 0.0
  %708 = vmatprep.subr.mxu0 0.0
  %709 = vmatpush2.msra.mxu0 0.0
  %710 = vmatprep.subr.mxu0 0.0
  %711 = vmatpush2.msra.mxu0 0.0
  %712 = vmatprep.subr.mxu0 0.0
  %713 = vmatpush2.msra.mxu0 0.0
  %714 = vmatprep.subr.mxu0 0.0
  %715 = vmatpush2.msra.mxu0 0.0
  %716 = vmatprep.subr.mxu0 0.0
  %717 = vmatpush2.msra.mxu0 0.0
  %718 = vmatprep.subr.mxu0 0.0
  %719 = vmatpush2.msra.mxu0 0.0
  %720 = vmatprep.subr.mxu0 0.0
  %721 = vmatpush2.msra.mxu0 0.0
  %722 = vmatprep.subr.mxu0 0.0
  %723 = vmatpush2.msra.mxu0 0.0
  %724 = vmatprep.subr.mxu0 0.0
  %725 = vmatpush2.msra.mxu0 0.0
  %726 = vmatprep.subr.mxu0 0.0
  %727 = vmatpush2.msra.mxu0 0.0
  %728 = vmatprep.subr.mxu0 0.0
  %729 = vmatpush2.msra.mxu0 0.0
  %730 = vmatprep.subr.mxu0 0.0
  %731 = vmatpush2.msra.mxu0 0.0
  %732 = vmatprep.subr.mxu0 0.0
  %733 = vmatpush2.msra.mxu0 0.0
  %734 = vmatprep.subr.mxu0 0.0
  %735 = vmatpush2.msra.mxu0 0.0
  %736 = vmatprep.subr.mxu0 0.0
  %737 = vmatpush2.msra.mxu0 0.0
  %738 = vmatprep.mubr.f32.mxu0 0.0
  %739 = vmatmul.mubr.f32.gmra.mxu0 %v669
  %v740 = vpop.f32.mrf.mxu0
  %v741 = vadd.f32 %v666, %v740
  %v742 = vpop.f32.mrf.mxu0
  %743 = vmatprep.mubr.f32.mxu0 0.0
  %744 = vmatmul.mubr.f32.gmra.mxu0 %v672
  %v745 = vpop.f32.mrf.mxu0
  %v746 = vadd.f32 %v666, %v745
  %v747 = vpop.f32.mrf.mxu0
  %748 = vdwg.mxu0
  %749 = vst [vmem:[%s18] sm:$0xff] %v741
  %750 = vst [vmem:[%s18 + $0x8] sm:$0xf] %v746
  %v751 = vld [vmem:[%s10] sm:$0xff]
  %v752 = vld [vmem:[%s10 + $0x8] sm:$0xff]
  %v753 = vld [vmem:[%s10 + $0x10] sm:$0xff]
  %v754 = vld [vmem:[%s10 + $0x18] sm:$0xff]
  %v755 = vld [vmem:[%s10 + $0x20] sm:$0xff]
  %v756 = vld [vmem:[%s10 + $0x28] sm:$0xff]
  %v757 = vld [vmem:[%s11] sm:$0xff]
  %v758 = vld [vmem:[%s11 + $0x8] sm:$0xff]
  %v759 = vld [vmem:[%s11 + $0x10] sm:$0xff]
  %v760 = vld [vmem:[%s11 + $0x18] sm:$0xff]
  %v761 = vld [vmem:[%s11 + $0x20] sm:$0xff]
  %v762 = vld [vmem:[%s11 + $0x28] sm:$0xff]
  %v763 = vld [vmem:[%s12] sm:$0xff]
  %v764 = vld [vmem:[%s12 + $0x8] sm:$0xff]
  %v765 = vld [vmem:[%s13] sm:$0xff]
  %v766 = vld [vmem:[%s13 + $0x8] sm:$0xff]
  %v767 = vld [vmem:[%s13 + $0x10] sm:$0xff]
  %v768 = vld [vmem:[%s13 + $0x18] sm:$0xff]
  %v769 = vld [vmem:[%s13 + $0x20] sm:$0xff]
  %v770 = vld [vmem:[%s13 + $0x28] sm:$0xff]
  %v771 = vmul.f32 %v157, %v751
  %v772 = vmul.f32 %v162, %v752
  %v773 = vmul.f32 %v167, %v753
  %v774 = vmul.f32 %v172, %v754
  %v775 = vmul.f32 %v177, %v755
  %v776 = vmul.f32 %v182, %v756
  %v777 = vmul.f32 %v157, %v757
  %v778 = vmul.f32 %v162, %v758
  %v779 = vmul.f32 %v167, %v759
  %v780 = vmul.f32 %v172, %v760
  %v781 = vmul.f32 %v177, %v761
  %v782 = vmul.f32 %v182, %v762
  %v784 = vsel %vm363, %v283, 0
  %v787 = vsel %vm363, %v288, 0
  %v790 = vsel %vm363, %v771, 0
  %v793 = vsel %vm363, %v772, 0
  %v796 = vsel %vm363, %v773, 0
  %v799 = vsel %vm363, %v774, 0
  %v802 = vsel %vm363, %v775, 0
  %v805 = vsel %vm363, %v776, 0
  %807 = vmatprep.subr.mxu0 0.0
  %808 = vmatpush1.xpose.msra.mxu0 0.0
  %809 = vmatprep.subr.mxu0 0.0
  %810 = vmatpush1.xpose.msra.mxu0 0.0
  %811 = vmatprep.subr.mxu0 0.0
  %812 = vmatpush1.xpose.msra.mxu0 0.0
  %813 = vmatprep.subr.mxu0 0.0
  %814 = vmatpush1.xpose.msra.mxu0 0.0
  %815 = vmatprep.subr.mxu0 0.0
  %816 = vmatpush1.xpose.msra.mxu0 0.0
  %817 = vmatprep.subr.mxu0 0.0
  %818 = vmatpush1.xpose.msra.mxu0 0.0
  %819 = vmatprep.subr.mxu0 0.0
  %820 = vmatpush1.xpose.msra.mxu0 0.0
  %821 = vmatprep.subr.mxu0 0.0
  %822 = vmatpush1.xpose.msra.mxu0 0.0
  %823 = vmatprep.subr.mxu0 0.0
  %824 = vmatpush1.xpose.msra.mxu0 0.0
  %825 = vmatprep.subr.mxu0 0.0
  %826 = vmatpush1.xpose.msra.mxu0 0.0
  %827 = vmatprep.subr.mxu0 0.0
  %828 = vmatpush1.xpose.msra.mxu0 %v805
  %829 = vmatprep.subr.mxu0 0.0
  %830 = vmatpush1.xpose.msra.mxu0 %v802
  %831 = vmatprep.subr.mxu0 0.0
  %832 = vmatpush1.xpose.msra.mxu0 %v799
  %833 = vmatprep.subr.mxu0 0.0
  %834 = vmatpush1.xpose.msra.mxu0 %v796
  %835 = vmatprep.subr.mxu0 0.0
  %836 = vmatpush1.xpose.msra.mxu0 %v793
  %837 = vmatprep.subr.mxu0 0.0
  %838 = vmatpush1.xpose.msra.mxu0 %v790
  %839 = vmatprep.subr.mxu0 0.0
  %840 = vmatpush2.xpose.msra.mxu0 0.0
  %841 = vmatprep.subr.mxu0 0.0
  %842 = vmatpush2.xpose.msra.mxu0 0.0
  %843 = vmatprep.subr.mxu0 0.0
  %844 = vmatpush2.xpose.msra.mxu0 0.0
  %845 = vmatprep.subr.mxu0 0.0
  %846 = vmatpush2.xpose.msra.mxu0 0.0
  %847 = vmatprep.subr.mxu0 0.0
  %848 = vmatpush2.xpose.msra.mxu0 0.0
  %849 = vmatprep.subr.mxu0 0.0
  %850 = vmatpush2.xpose.msra.mxu0 0.0
  %851 = vmatprep.subr.mxu0 0.0
  %852 = vmatpush2.xpose.msra.mxu0 0.0
  %853 = vmatprep.subr.mxu0 0.0
  %854 = vmatpush2.xpose.msra.mxu0 0.0
  %855 = vmatprep.subr.mxu0 0.0
  %856 = vmatpush2.xpose.msra.mxu0 0.0
  %857 = vmatprep.subr.mxu0 0.0
  %858 = vmatpush2.xpose.msra.mxu0 0.0
  %859 = vmatprep.subr.mxu0 0.0
  %860 = vmatpush2.xpose.msra.mxu0 0.0
  %861 = vmatprep.subr.mxu0 0.0
  %862 = vmatpush2.xpose.msra.mxu0 0.0
  %863 = vmatprep.subr.mxu0 0.0
  %864 = vmatpush2.xpose.msra.mxu0 0.0
  %865 = vmatprep.subr.mxu0 0.0
  %866 = vmatpush2.xpose.msra.mxu0 0.0
  %867 = vmatprep.subr.mxu0 0.0
  %868 = vmatpush2.xpose.msra.mxu0 0.0
  %869 = vmatprep.subr.mxu0 0.0
  %870 = vmatpush2.xpose.msra.mxu0 0.0
  %871 = vmatprep.mubr.f32.mxu0 0.0
  %872 = vmatmul.mubr.f32.gmra.mxu0 %v784
  %v873 = vpop.f32.mrf.mxu0
  %v874 = vadd.f32 %v763, %v873
  %v875 = vpop.f32.mrf.mxu0
  %876 = vmatprep.mubr.f32.mxu0 0.0
  %877 = vmatmul.mubr.f32.gmra.mxu0 %v787
  %v878 = vpop.f32.mrf.mxu0
  %v879 = vadd.f32 %v764, %v878
  %v880 = vpop.f32.mrf.mxu0
  %881 = vdwg.mxu0
  %vm882 = vcmask 392192
  %v883 = vsel %vm882, %v874, -inf
  %884 = vmax.xlane.f32.xlu0 %v883
  %v885 = vpop.xlane.xlu0 %884
  %v886 = vsel %vm882, %v879, -inf
  %887 = vmax.xlane.f32.xlu0 %v886
  %v888 = vpop.xlane.xlu0 %887
  %v889 = vsub.f32 %v874, %v885
  %v890 = vsub.f32 %v879, %v888
  %v891 = vmul.f32 %v889, 1.442695
  %v892 = vpow.pop %v891
  %v893 = vmul.f32 %v890, 1.442695
  %v894 = vpow.pop %v893
  %v896 = vsel %vm882, %v892, 0
  %v899 = vsel %vm882, %v894, 0
  %901 = vmatprep.subr.mxu0 0.0
  %902 = vmatpush1.msra.mxu0 0.0
  %903 = vmatprep.subr.mxu0 0.0
  %904 = vmatpush1.msra.mxu0 0.0
  %905 = vmatprep.subr.mxu0 0.0
  %906 = vmatpush1.msra.mxu0 0.0
  %907 = vmatprep.subr.mxu0 0.0
  %908 = vmatpush1.msra.mxu0 0.0
  %909 = vmatprep.subr.mxu0 0.0
  %910 = vmatpush1.msra.mxu0 0.0
  %911 = vmatprep.subr.mxu0 0.0
  %912 = vmatpush1.msra.mxu0 0.0
  %913 = vmatprep.subr.mxu0 0.0
  %914 = vmatpush1.msra.mxu0 0.0
  %915 = vmatprep.subr.mxu0 0.0
  %916 = vmatpush1.msra.mxu0 0.0
  %917 = vmatprep.subr.mxu0 0.0
  %918 = vmatpush1.msra.mxu0 0.0
  %919 = vmatprep.subr.mxu0 0.0
  %920 = vmatpush1.msra.mxu0 0.0
  %921 = vmatprep.subr.mxu0 0.0
  %922 = vmatpush1.msra.mxu0 %v770
  %923 = vmatprep.subr.mxu0 0.0
  %924 = vmatpush1.msra.mxu0 %v769
  %925 = vmatprep.subr.mxu0 0.0
  %926 = vmatpush1.msra.mxu0 %v768
  %927 = vmatprep.subr.mxu0 0.0
  %928 = vmatpush1.msra.mxu0 %v767
  %929 = vmatprep.subr.mxu0 0.0
  %930 = vmatpush1.msra.mxu0 %v766
  %931 = vmatprep.subr.mxu0 0.0
  %932 = vmatpush1.msra.mxu0 %v765
  %933 = vmatprep.subr.mxu0 0.0
  %934 = vmatpush2.msra.mxu0 0.0
  %935 = vmatprep.subr.mxu0 0.0
  %936 = vmatpush2.msra.mxu0 0.0
  %937 = vmatprep.subr.mxu0 0.0
  %938 = vmatpush2.msra.mxu0 0.0
  %939 = vmatprep.subr.mxu0 0.0
  %940 = vmatpush2.msra.mxu0 0.0
  %941 = vmatprep.subr.mxu0 0.0
  %942 = vmatpush2.msra.mxu0 0.0
  %943 = vmatprep.subr.mxu0 0.0
  %944 = vmatpush2.msra.mxu0 0.0
  %945 = vmatprep.subr.mxu0 0.0
  %946 = vmatpush2.msra.mxu0 0.0
  %947 = vmatprep.subr.mxu0 0.0
  %948 = vmatpush2.msra.mxu0 0.0
  %949 = vmatprep.subr.mxu0 0.0
  %950 = vmatpush2.msra.mxu0 0.0
  %951 = vmatprep.subr.mxu0 0.0
  %952 = vmatpush2.msra.mxu0 0.0
  %953 = vmatprep.subr.mxu0 0.0
  %954 = vmatpush2.msra.mxu0 0.0
  %955 = vmatprep.subr.mxu0 0.0
  %956 = vmatpush2.msra.mxu0 0.0
  %957 = vmatprep.subr.mxu0 0.0
  %958 = vmatpush2.msra.mxu0 0.0
  %959 = vmatprep.subr.mxu0 0.0
  %960 = vmatpush2.msra.mxu0 0.0
  %961 = vmatprep.subr.mxu0 0.0
  %962 = vmatpush2.msra.mxu0 0.0
  %963 = vmatprep.subr.mxu0 0.0
  %964 = vmatpush2.msra.mxu0 0.0
  %965 = vmatprep.mubr.f32.mxu0 0.0
  %966 = vmatmul.mubr.f32.gmra.mxu0 %v896
  %v967 = vpop.f32.mrf.mxu0
  %v968 = vadd.f32 0.0, %v967
  %v969 = vpop.f32.mrf.mxu0
  %970 = vmatprep.mubr.f32.mxu0 0.0
  %971 = vmatmul.mubr.f32.gmra.mxu0 %v899
  %v972 = vpop.f32.mrf.mxu0
  %v973 = vadd.f32 0.0, %v972
  %v974 = vpop.f32.mrf.mxu0
  %975 = vdwg.mxu0
  %v976 = vrcp.pop %v968
  %v977 = vmul.f32 %v892, %v976
  %v978 = vrcp.pop %v973
  %v979 = vmul.f32 %v894, %v978
  %v981 = vsel %vm882, %v977, 0
  %v984 = vsel %vm882, %v979, 0
  %986 = vmatprep.subr.mxu0 0.0
  %987 = vmatpush1.msra.mxu0 0.0
  %988 = vmatprep.subr.mxu0 0.0
  %989 = vmatpush1.msra.mxu0 0.0
  %990 = vmatprep.subr.mxu0 0.0
  %991 = vmatpush1.msra.mxu0 0.0
  %992 = vmatprep.subr.mxu0 0.0
  %993 = vmatpush1.msra.mxu0 0.0
  %994 = vmatprep.subr.mxu0 0.0
  %995 = vmatpush1.msra.mxu0 0.0
  %996 = vmatprep.subr.mxu0 0.0
  %997 = vmatpush1.msra.mxu0 0.0
  %998 = vmatprep.subr.mxu0 0.0
  %999 = vmatpush1.msra.mxu0 0.0
  %1000 = vmatprep.subr.mxu0 0.0
  %1001 = vmatpush1.msra.mxu0 0.0
  %1002 = vmatprep.subr.mxu0 0.0
  %1003 = vmatpush1.msra.mxu0 0.0
  %1004 = vmatprep.subr.mxu0 0.0
  %1005 = vmatpush1.msra.mxu0 0.0
  %1006 = vmatprep.subr.mxu0 0.0
  %1007 = vmatpush1.msra.mxu0 %v782
  %1008 = vmatprep.subr.mxu0 0.0
  %1009 = vmatpush1.msra.mxu0 %v781
  %1010 = vmatprep.subr.mxu0 0.0
  %1011 = vmatpush1.msra.mxu0 %v780
  %1012 = vmatprep.subr.mxu0 0.0
  %1013 = vmatpush1.msra.mxu0 %v779
  %1014 = vmatprep.subr.mxu0 0.0
  %1015 = vmatpush1.msra.mxu0 %v778
  %1016 = vmatprep.subr.mxu0 0.0
  %1017 = vmatpush1.msra.mxu0 %v777
  %1018 = vmatprep.subr.mxu0 0.0
  %1019 = vmatpush2.msra.mxu0 0.0
  %1020 = vmatprep.subr.mxu0 0.0
  %1021 = vmatpush2.msra.mxu0 0.0
  %1022 = vmatprep.subr.mxu0 0.0
  %1023 = vmatpush2.msra.mxu0 0.0
  %1024 = vmatprep.subr.mxu0 0.0
  %1025 = vmatpush2.msra.mxu0 0.0
  %1026 = vmatprep.subr.mxu0 0.0
  %1027 = vmatpush2.msra.mxu0 0.0
  %1028 = vmatprep.subr.mxu0 0.0
  %1029 = vmatpush2.msra.mxu0 0.0
  %1030 = vmatprep.subr.mxu0 0.0
  %1031 = vmatpush2.msra.mxu0 0.0
  %1032 = vmatprep.subr.mxu0 0.0
  %1033 = vmatpush2.msra.mxu0 0.0
  %1034 = vmatprep.subr.mxu0 0.0
  %1035 = vmatpush2.msra.mxu0 0.0
  %1036 = vmatprep.subr.mxu0 0.0
  %1037 = vmatpush2.msra.mxu0 0.0
  %1038 = vmatprep.subr.mxu0 0.0
  %1039 = vmatpush2.msra.mxu0 0.0
  %1040 = vmatprep.subr.mxu0 0.0
  %1041 = vmatpush2.msra.mxu0 0.0
  %1042 = vmatprep.subr.mxu0 0.0
  %1043 = vmatpush2.msra.mxu0 0.0
  %1044 = vmatprep.subr.mxu0 0.0
  %1045 = vmatpush2.msra.mxu0 0.0
  %1046 = vmatprep.subr.mxu0 0.0
  %1047 = vmatpush2.msra.mxu0 0.0
  %1048 = vmatprep.subr.mxu0 0.0
  %1049 = vmatpush2.msra.mxu0 0.0
  %1050 = vmatprep.mubr.f32.mxu0 0.0
  %1051 = vmatmul.mubr.f32.gmra.mxu0 %v981
  %v1052 = vpop.f32.mrf.mxu0
  %v1053 = vadd.f32 0.0, %v1052
  %v1054 = vpop.f32.mrf.mxu0
  %1055 = vmatprep.mubr.f32.mxu0 0.0
  %1056 = vmatmul.mubr.f32.gmra.mxu0 %v984
  %v1057 = vpop.f32.mrf.mxu0
  %v1058 = vadd.f32 0.0, %v1057
  %v1059 = vpop.f32.mrf.mxu0
  %1060 = vdwg.mxu0
  %v1061 = vld [vmem:[%s16] sm:$0xff]
  %v1062 = vld [vmem:[%s16 + $0x8] sm:$0xff]
  %v1063 = vld [vmem:[%s16 + $0x10] sm:$0xff]
  %v1064 = vld [vmem:[%s16 + $0x18] sm:$0xff]
  %v1065 = vld [vmem:[%s16 + $0x20] sm:$0xff]
  %v1066 = vld [vmem:[%s16 + $0x28] sm:$0xff]
  %v1067 = vld [vmem:[%s16 + $0x30] sm:$0xff]
  %v1068 = vld [vmem:[%s16 + $0x38] sm:$0xff]
  %v1069 = vld [vmem:[%s16 + $0x40] sm:$0xff]
  %v1070 = vld [vmem:[%s16 + $0x48] sm:$0xff]
  %v1071 = vld [vmem:[%s16 + $0x50] sm:$0xff]
  %v1072 = vld [vmem:[%s16 + $0x58] sm:$0xff]
  %v1073 = vld [vmem:[%s17] sm:$0x1]
  %v1075 = vlaneseq
  %v1076 = vshrl.u32 %v1075, 7
  %v1077 = vsub.s32 0, %v1076
  %v1078 = vrot.slane %v1073, %v1077
  %v1081 = vsel %vm363, %v1053, 0
  %v1084 = vsel %vm363, %v1058, 0
  %1086 = vmatprep.subr.mxu0 0.0
  %1087 = vmatpush1.msra.mxu0 0.0
  %1088 = vmatprep.subr.mxu0 0.0
  %1089 = vmatpush1.msra.mxu0 0.0
  %1090 = vmatprep.subr.mxu0 0.0
  %1091 = vmatpush1.msra.mxu0 0.0
  %1092 = vmatprep.subr.mxu0 0.0
  %1093 = vmatpush1.msra.mxu0 0.0
  %1094 = vmatprep.subr.mxu0 0.0
  %1095 = vmatpush1.msra.mxu0 %v1072
  %1096 = vmatprep.subr.mxu0 0.0
  %1097 = vmatpush1.msra.mxu0 %v1071
  %1098 = vmatprep.subr.mxu0 0.0
  %1099 = vmatpush1.msra.mxu0 %v1070
  %1100 = vmatprep.subr.mxu0 0.0
  %1101 = vmatpush1.msra.mxu0 %v1069
  %1102 = vmatprep.subr.mxu0 0.0
  %1103 = vmatpush1.msra.mxu0 %v1068
  %1104 = vmatprep.subr.mxu0 0.0
  %1105 = vmatpush1.msra.mxu0 %v1067
  %1106 = vmatprep.subr.mxu0 0.0
  %1107 = vmatpush1.msra.mxu0 %v1066
  %1108 = vmatprep.subr.mxu0 0.0
  %1109 = vmatpush1.msra.mxu0 %v1065
  %1110 = vmatprep.subr.mxu0 0.0
  %1111 = vmatpush1.msra.mxu0 %v1064
  %1112 = vmatprep.subr.mxu0 0.0
  %1113 = vmatpush1.msra.mxu0 %v1063
  %1114 = vmatprep.subr.mxu0 0.0
  %1115 = vmatpush1.msra.mxu0 %v1062
  %1116 = vmatprep.subr.mxu0 0.0
  %1117 = vmatpush1.msra.mxu0 %v1061
  %1118 = vmatprep.subr.mxu0 0.0
  %1119 = vmatpush2.msra.mxu0 0.0
  %1120 = vmatprep.subr.mxu0 0.0
  %1121 = vmatpush2.msra.mxu0 0.0
  %1122 = vmatprep.subr.mxu0 0.0
  %1123 = vmatpush2.msra.mxu0 0.0
  %1124 = vmatprep.subr.mxu0 0.0
  %1125 = vmatpush2.msra.mxu0 0.0
  %1126 = vmatprep.subr.mxu0 0.0
  %1127 = vmatpush2.msra.mxu0 0.0
  %1128 = vmatprep.subr.mxu0 0.0
  %1129 = vmatpush2.msra.mxu0 0.0
  %1130 = vmatprep.subr.mxu0 0.0
  %1131 = vmatpush2.msra.mxu0 0.0
  %1132 = vmatprep.subr.mxu0 0.0
  %1133 = vmatpush2.msra.mxu0 0.0
  %1134 = vmatprep.subr.mxu0 0.0
  %1135 = vmatpush2.msra.mxu0 0.0
  %1136 = vmatprep.subr.mxu0 0.0
  %1137 = vmatpush2.msra.mxu0 0.0
  %1138 = vmatprep.subr.mxu0 0.0
  %1139 = vmatpush2.msra.mxu0 0.0
  %1140 = vmatprep.subr.mxu0 0.0
  %1141 = vmatpush2.msra.mxu0 0.0
  %1142 = vmatprep.subr.mxu0 0.0
  %1143 = vmatpush2.msra.mxu0 0.0
  %1144 = vmatprep.subr.mxu0 0.0
  %1145 = vmatpush2.msra.mxu0 0.0
  %1146 = vmatprep.subr.mxu0 0.0
  %1147 = vmatpush2.msra.mxu0 0.0
  %1148 = vmatprep.subr.mxu0 0.0
  %1149 = vmatpush2.msra.mxu0 0.0
  %1150 = vmatprep.mubr.f32.mxu0 0.0
  %1151 = vmatmul.mubr.f32.gmra.mxu0 %v1081
  %v1152 = vpop.f32.mrf.mxu0
  %v1153 = vadd.f32 %v1078, %v1152
  %v1154 = vpop.f32.mrf.mxu0
  %1155 = vmatprep.mubr.f32.mxu0 0.0
  %1156 = vmatmul.mubr.f32.gmra.mxu0 %v1084
  %v1157 = vpop.f32.mrf.mxu0
  %v1158 = vadd.f32 %v1078, %v1157
  %v1159 = vpop.f32.mrf.mxu0
  %1160 = vdwg.mxu0
  %1161 = vst [vmem:[%s19] sm:$0xff] %v1153
  %1162 = vst [vmem:[%s19 + $0x8] sm:$0xff] %v1158
  // Predicated region
  $region74: #{duma_layer.1} parent=0 // pred_check
    _
  $region75: #{duma_layer.1} parent=0 // pred_check_branch
    %1164 = sbr.rel (0) target = $region77
  $region76: #{duma_layer.1} parent=0 // pred_region
    _
  $region77: #{duma_layer.1} parent=0 // pred_fallthru
    _
  // Predicated region
  $region78: #{duma_layer.1} parent=0 // pred_check
    _
  $region79: #{duma_layer.1} parent=0 // pred_check_branch
    %1166 = sbr.rel (0) target = $region81
  $region80: #{duma_layer.1} parent=0 // pred_region
    _
  $region81: #{duma_layer.1} parent=0 // pred_fallthru
    _
  // Predicated region
  $region82: #{duma_layer.1} parent=0 // pred_check
    _
  $region83: #{duma_layer.1} parent=0 // pred_check_branch
    %1168 = sbr.rel (0) target = $region85
  $region84: #{duma_layer.1} parent=0 // pred_region
    _
  $region85: #{duma_layer.1} parent=0 // pred_fallthru
    _
  // Predicated region
  $region86: #{duma_layer.1} parent=0 // pred_check
    _
  $region87: #{duma_layer.1} parent=0 // pred_check_branch
    %1170 = sbr.rel (0) target = $region89
  $region88: #{duma_layer.1} parent=0 // pred_region
    _
  $region89: #{duma_layer.1} parent=0 // pred_fallthru
    _

</llo_original>
